<compile_context>
chip_gen: v7x
topology: tpu7x:2x2x1
jax: 0.10.0
libtpu: 0.0.40
codegen_flags: <defaults>
</compile_context>

<pallas_src>
import jax
import jax.numpy as jnp
from jax.experimental import pallas as pl
from jax.experimental.pallas import tpu as pltpu

LANE = 128          # padded feature / lane width
NUM_LAYERS = 5
NEG_INF = -1e9      # bias value for padded class logits


def _gin_fused_kernel(a_ref, x_ref, w1s_ref, b1s_ref, w2s_ref, b2s_ref,
                      gammas_ref, betas_ref, p_ref,
                      fw1_ref, fb1_ref, fw2_ref, fb2_ref, o_ref):
    a = a_ref[...]                     # [N, N]   bf16, A_gin = adj + (1+eps)*I
    h = x_ref[...]                     # [N, 128] f32, features zero-padded to 128 lanes
    for l in range(NUM_LAYERS):        # static unroll; all layers share VMEM-resident h
        # GINConv: sum aggregation + self term (folded into A) followed by 2-layer MLP
        agg = jnp.dot(a, h.astype(jnp.bfloat16),
                      preferred_element_type=jnp.float32)               # [N, 128]
        z = jnp.dot(agg.astype(jnp.bfloat16), w1s_ref[l],
                    preferred_element_type=jnp.float32) + b1s_ref[l]
        z = jnp.maximum(z, 0.0)                                          # MLP inner ReLU
        z = jnp.dot(z.astype(jnp.bfloat16), w2s_ref[l],
                    preferred_element_type=jnp.float32) + b2s_ref[l]
        z = jnp.maximum(z, 0.0)                                          # F.relu(conv(x))
        # BatchNorm1d (training batch stats, biased var), single reduction pass
        mu = jnp.mean(z, axis=0, keepdims=True)
        ex2 = jnp.mean(z * z, axis=0, keepdims=True)
        var = ex2 - mu * mu
        h = (z - mu) * jax.lax.rsqrt(var + 1e-5) * gammas_ref[l] + betas_ref[l]

    # global_add_pool:  P[g, i] = 1 if batch[i] == g else 0
    pooled = jnp.dot(p_ref[...], h.astype(jnp.bfloat16),
                     preferred_element_type=jnp.float32)                 # [G, 128]
    t = jnp.dot(pooled.astype(jnp.bfloat16), fw1_ref[...],
                preferred_element_type=jnp.float32) + fb1_ref[...]
    t = jnp.maximum(t, 0.0)                                              # relu(fc1)
    logits = jnp.dot(t.astype(jnp.bfloat16), fw2_ref[...],
                     preferred_element_type=jnp.float32) + fb2_ref[...]  # pad lanes ~ -inf
    m = jnp.max(logits, axis=-1, keepdims=True)
    zc = logits - m
    lse = jnp.log(jnp.sum(jnp.exp(zc), axis=-1, keepdims=True))
    o_ref[...] = zc - lse                                                # log_softmax


def _pad_last(a, width, value=0.0):
    pad = width - a.shape[-1]
    cfg = [(0, 0)] * (a.ndim - 1) + [(0, pad)]
    return jnp.pad(a, cfg, constant_values=value)


def gin_forward(x, edge_index, batch, layer_params, head_params,
                *, num_classes, num_graphs, eps=0.0):
    """layer_params: 5 tuples (w1 [fin,dim], b1 [dim], w2 [dim,dim], b2 [dim],
                               gamma [dim], beta [dim]);  weights stored [in, out].
       head_params: (fw1 [dim,dim], fb1 [dim], fw2 [dim,C], fb2 [C])."""
    n = x.shape[0]

    # ---- plain-JAX glue: dense GIN aggregation matrix and add-pool matrix ----
    adj = jnp.zeros((n, n), jnp.float32).at[edge_index[1], edge_index[0]].add(1.0)
    a_gin = (adj + (1.0 + eps) * jnp.eye(n, dtype=jnp.float32)).astype(jnp.bfloat16)
    pool = (batch[None, :] == jnp.arange(num_graphs)[:, None]).astype(jnp.bfloat16)

    # ---- pad / stack parameters (lane dim -> 128, matmul weights -> bf16) ----
    x_p = _pad_last(x.astype(jnp.float32), LANE)

    w1s, b1s, w2s, b2s, gammas, betas = [], [], [], [], [], []
    for (w1, b1, w2, b2, gamma, beta) in layer_params:
        w1p = _pad_last(w1, LANE)
        w1p = jnp.pad(w1p, ((0, LANE - w1p.shape[0]), (0, 0)))
        w2p = jnp.pad(_pad_last(w2, LANE), ((0, LANE - w2.shape[0]), (0, 0)))
        w1s.append(w1p.astype(jnp.bfloat16))
        w2s.append(w2p.astype(jnp.bfloat16))
        b1s.append(_pad_last(b1[None, :], LANE))
        b2s.append(_pad_last(b2[None, :], LANE))
        gammas.append(_pad_last(gamma[None, :], LANE, value=1.0))
        betas.append(_pad_last(beta[None, :], LANE))
    w1s, w2s = jnp.stack(w1s), jnp.stack(w2s)              # [5, 128, 128] bf16
    b1s, b2s = jnp.stack(b1s), jnp.stack(b2s)              # [5, 1, 128]   f32
    gammas, betas = jnp.stack(gammas), jnp.stack(betas)    # [5, 1, 128]   f32

    fw1, fb1, fw2, fb2 = head_params
    fw1p = jnp.pad(_pad_last(fw1, LANE),
                   ((0, LANE - fw1.shape[0]), (0, 0))).astype(jnp.bfloat16)
    fb1p = _pad_last(fb1[None, :], LANE)
    fw2p = jnp.pad(_pad_last(fw2, LANE),
                   ((0, LANE - fw2.shape[0]), (0, 0))).astype(jnp.bfloat16)
    fb2p = _pad_last(fb2[None, :], LANE, value=NEG_INF)    # padded classes -> ~-inf logit

    vmem = pl.BlockSpec(memory_space=pltpu.MemorySpace.VMEM)
    out = pl.pallas_call(
        _gin_fused_kernel,
        out_shape=jax.ShapeDtypeStruct((num_graphs, LANE), jnp.float32),
        in_specs=[vmem] * 13,
        out_specs=vmem,
    )(a_gin, x_p, w1s, b1s, w2s, b2s, gammas, betas, pool, fw1p, fb1p, fw2p, fb2p)
    return out[:, :num_classes]


if __name__ == "__main__":
    num_features, num_classes, dim = 4, 3, 32
    nodes_per_graph, num_graphs = 8, 2
    N = nodes_per_graph * num_graphs

    key = jax.random.PRNGKey(0)
    keys = jax.random.split(key, 64)

    # Node features [N, num_features]
    x = jax.random.normal(keys[0], (N, num_features), jnp.float32)

    # edge_index: bidirectional ring inside each graph -> shape [2, E]
    src, dst = [], []
    for g in range(num_graphs):
        base = g * nodes_per_graph
        for i in range(nodes_per_graph):
            j = (i + 1) % nodes_per_graph
            src += [base + i, base + j]
            dst += [base + j, base + i]
    edge_index = jnp.array([src, dst], dtype=jnp.int32)
    batch = jnp.array(sum([[g] * nodes_per_graph for g in range(num_graphs)], []),
                      dtype=jnp.int32)

    # Deterministic synthetic parameter init (weights stored as [in, out] for x @ W)
    def lin_w(k, fin, fout, scale=0.1):
        return scale * jax.random.normal(k, (fin, fout), jnp.float32)

    ki = 1
    layer_params = []
    fin = num_features
    for _ in range(NUM_LAYERS):
        w1 = lin_w(keys[ki], fin, dim); ki += 1
        b1 = 0.01 * jax.random.normal(keys[ki], (dim,), jnp.float32); ki += 1
        w2 = lin_w(keys[ki], dim, dim); ki += 1
        b2 = 0.01 * jax.random.normal(keys[ki], (dim,), jnp.float32); ki += 1
        gamma = jnp.ones((dim,), jnp.float32)    # BatchNorm1d default affine init
        beta = jnp.zeros((dim,), jnp.float32)
        layer_params.append((w1, b1, w2, b2, gamma, beta))
        fin = dim

    fw1 = lin_w(keys[ki], dim, dim); ki += 1
    fb1 = 0.01 * jax.random.normal(keys[ki], (dim,), jnp.float32); ki += 1
    fw2 = lin_w(keys[ki], dim, num_classes); ki += 1
    fb2 = 0.01 * jax.random.normal(keys[ki], (num_classes,), jnp.float32); ki += 1
    head_params = (fw1, fb1, fw2, fb2)

    out = gin_forward(x, edge_index, batch, layer_params, head_params,
                      num_classes=num_classes, num_graphs=num_graphs)
    out = jax.block_until_ready(out)
    assert out.shape == (num_graphs, num_classes)
    assert bool(jnp.all(jnp.isfinite(out)))
    # log_softmax rows must sum to ~1 in probability space
    assert bool(jnp.allclose(jnp.sum(jnp.exp(out), axis=-1), 1.0, atol=1e-5))
    print("KERNEL_OK")
</pallas_src>

<mosaic_0001>
module attributes {stable_mosaic.version = 11 : i64} {
  func.func @_gin_fused_kernel(%arg0: memref<16x16xbf16, #tpu.memory_space<vmem>>, %arg1: memref<16x128xf32, #tpu.memory_space<vmem>>, %arg2: memref<5x128x128xbf16, #tpu.memory_space<vmem>>, %arg3: memref<5x1x128xf32, #tpu.memory_space<vmem>>, %arg4: memref<5x128x128xbf16, #tpu.memory_space<vmem>>, %arg5: memref<5x1x128xf32, #tpu.memory_space<vmem>>, %arg6: memref<5x1x128xf32, #tpu.memory_space<vmem>>, %arg7: memref<5x1x128xf32, #tpu.memory_space<vmem>>, %arg8: memref<2x16xbf16, #tpu.memory_space<vmem>>, %arg9: memref<128x128xbf16, #tpu.memory_space<vmem>>, %arg10: memref<1x128xf32, #tpu.memory_space<vmem>>, %arg11: memref<128x128xbf16, #tpu.memory_space<vmem>>, %arg12: memref<1x128xf32, #tpu.memory_space<vmem>>, %arg13: memref<2x128xf32, #tpu.memory_space<vmem>>) attributes {dimension_semantics = [], scalar_prefetch = 0 : i64, scratch_operands = 0 : i64, tpu.core_type = #tpu.core_type<tc>} {
    %c0 = arith.constant 0 : index
    %c0_0 = arith.constant 0 : index
    %0 = vector.load %arg0[%c0, %c0_0] : memref<16x16xbf16, #tpu.memory_space<vmem>>, vector<16x16xbf16>
    %c0_1 = arith.constant 0 : index
    %c0_2 = arith.constant 0 : index
    %1 = vector.load %arg1[%c0_1, %c0_2] : memref<16x128xf32, #tpu.memory_space<vmem>>, vector<16x128xf32>
    %2 = arith.truncf %1 : vector<16x128xf32> to vector<16x128xbf16>
    %cst = arith.constant dense<0.000000e+00> : vector<16x128xf32>
    %3 = tpu.matmul %0, %2, %cst {dimension_numbers = #tpu.dot_dimension_numbers<[1], [0], [0], [1], [0, 0, 1, 1], [], []>} : vector<16x16xbf16>, vector<16x128xbf16>, vector<16x128xf32> -> vector<16x128xf32>
    %4 = arith.truncf %3 : vector<16x128xf32> to vector<16x128xbf16>
    %c0_3 = arith.constant 0 : index
    %c0_4 = arith.constant 0 : index
    %c0_5 = arith.constant 0 : index
    %5 = vector.load %arg2[%c0_3, %c0_4, %c0_5] : memref<5x128x128xbf16, #tpu.memory_space<vmem>>, vector<1x128x128xbf16>
    %6 = vector.shape_cast %5 : vector<1x128x128xbf16> to vector<128x128xbf16>
    %cst_6 = arith.constant dense<0.000000e+00> : vector<16x128xf32>
    %7 = tpu.matmul %4, %6, %cst_6 {dimension_numbers = #tpu.dot_dimension_numbers<[1], [0], [0], [1], [0, 0, 1, 1], [], []>} : vector<16x128xbf16>, vector<128x128xbf16>, vector<16x128xf32> -> vector<16x128xf32>
    %c0_7 = arith.constant 0 : index
    %c0_8 = arith.constant 0 : index
    %c0_9 = arith.constant 0 : index
    %8 = vector.load %arg3[%c0_7, %c0_8, %c0_9] : memref<5x1x128xf32, #tpu.memory_space<vmem>>, vector<1x1x128xf32>
    %9 = vector.shape_cast %8 : vector<1x1x128xf32> to vector<1x128xf32>
    %10 = vector.broadcast %9 : vector<1x128xf32> to vector<16x128xf32>
    %11 = arith.addf %7, %10 : vector<16x128xf32>
    %cst_10 = arith.constant 0.000000e+00 : f32
    %12 = vector.broadcast %cst_10 : f32 to vector<16x128xf32>
    %13 = arith.maximumf %11, %12 : vector<16x128xf32>
    %14 = arith.truncf %13 : vector<16x128xf32> to vector<16x128xbf16>
    %c0_11 = arith.constant 0 : index
    %c0_12 = arith.constant 0 : index
    %c0_13 = arith.constant 0 : index
    %15 = vector.load %arg4[%c0_11, %c0_12, %c0_13] : memref<5x128x128xbf16, #tpu.memory_space<vmem>>, vector<1x128x128xbf16>
    %16 = vector.shape_cast %15 : vector<1x128x128xbf16> to vector<128x128xbf16>
    %cst_14 = arith.constant dense<0.000000e+00> : vector<16x128xf32>
    %17 = tpu.matmul %14, %16, %cst_14 {dimension_numbers = #tpu.dot_dimension_numbers<[1], [0], [0], [1], [0, 0, 1, 1], [], []>} : vector<16x128xbf16>, vector<128x128xbf16>, vector<16x128xf32> -> vector<16x128xf32>
    %c0_15 = arith.constant 0 : index
    %c0_16 = arith.constant 0 : index
    %c0_17 = arith.constant 0 : index
    %18 = vector.load %arg5[%c0_15, %c0_16, %c0_17] : memref<5x1x128xf32, #tpu.memory_space<vmem>>, vector<1x1x128xf32>
    %19 = vector.shape_cast %18 : vector<1x1x128xf32> to vector<1x128xf32>
    %20 = vector.broadcast %19 : vector<1x128xf32> to vector<16x128xf32>
    %21 = arith.addf %17, %20 : vector<16x128xf32>
    %cst_18 = arith.constant 0.000000e+00 : f32
    %22 = vector.broadcast %cst_18 : f32 to vector<16x128xf32>
    %23 = arith.maximumf %21, %22 : vector<16x128xf32>
    %cst_19 = arith.constant dense<0.000000e+00> : vector<128xf32>
    %24 = vector.multi_reduction <add>, %23, %cst_19 [0] : vector<16x128xf32> to vector<128xf32>
    %25 = vector.shape_cast %24 : vector<128xf32> to vector<1x128xf32>
    %cst_20 = arith.constant 1.600000e+01 : f32
    %26 = vector.broadcast %cst_20 : f32 to vector<1x128xf32>
    %27 = arith.divf %25, %26 : vector<1x128xf32>
    %28 = arith.mulf %23, %23 : vector<16x128xf32>
    %cst_21 = arith.constant dense<0.000000e+00> : vector<128xf32>
    %29 = vector.multi_reduction <add>, %28, %cst_21 [0] : vector<16x128xf32> to vector<128xf32>
    %30 = vector.shape_cast %29 : vector<128xf32> to vector<1x128xf32>
    %cst_22 = arith.constant 1.600000e+01 : f32
    %31 = vector.broadcast %cst_22 : f32 to vector<1x128xf32>
    %32 = arith.divf %30, %31 : vector<1x128xf32>
    %33 = arith.mulf %27, %27 : vector<1x128xf32>
    %34 = arith.subf %32, %33 : vector<1x128xf32>
    %35 = vector.broadcast %27 : vector<1x128xf32> to vector<16x128xf32>
    %36 = arith.subf %23, %35 : vector<16x128xf32>
    %cst_23 = arith.constant 9.99999974E-6 : f32
    %37 = vector.broadcast %cst_23 : f32 to vector<1x128xf32>
    %38 = arith.addf %34, %37 : vector<1x128xf32>
    %39 = math.rsqrt %38 : vector<1x128xf32>
    %40 = vector.broadcast %39 : vector<1x128xf32> to vector<16x128xf32>
    %41 = arith.mulf %36, %40 : vector<16x128xf32>
    %c0_24 = arith.constant 0 : index
    %c0_25 = arith.constant 0 : index
    %c0_26 = arith.constant 0 : index
    %42 = vector.load %arg6[%c0_24, %c0_25, %c0_26] : memref<5x1x128xf32, #tpu.memory_space<vmem>>, vector<1x1x128xf32>
    %43 = vector.shape_cast %42 : vector<1x1x128xf32> to vector<1x128xf32>
    %44 = vector.broadcast %43 : vector<1x128xf32> to vector<16x128xf32>
    %45 = arith.mulf %41, %44 : vector<16x128xf32>
    %c0_27 = arith.constant 0 : index
    %c0_28 = arith.constant 0 : index
    %c0_29 = arith.constant 0 : index
    %46 = vector.load %arg7[%c0_27, %c0_28, %c0_29] : memref<5x1x128xf32, #tpu.memory_space<vmem>>, vector<1x1x128xf32>
    %47 = vector.shape_cast %46 : vector<1x1x128xf32> to vector<1x128xf32>
    %48 = vector.broadcast %47 : vector<1x128xf32> to vector<16x128xf32>
    %49 = arith.addf %45, %48 : vector<16x128xf32>
    %50 = arith.truncf %49 : vector<16x128xf32> to vector<16x128xbf16>
    %cst_30 = arith.constant dense<0.000000e+00> : vector<16x128xf32>
    %51 = tpu.matmul %0, %50, %cst_30 {dimension_numbers = #tpu.dot_dimension_numbers<[1], [0], [0], [1], [0, 0, 1, 1], [], []>} : vector<16x16xbf16>, vector<16x128xbf16>, vector<16x128xf32> -> vector<16x128xf32>
    %52 = arith.truncf %51 : vector<16x128xf32> to vector<16x128xbf16>
    %c1 = arith.constant 1 : index
    %c0_31 = arith.constant 0 : index
    %c0_32 = arith.constant 0 : index
    %53 = vector.load %arg2[%c1, %c0_31, %c0_32] : memref<5x128x128xbf16, #tpu.memory_space<vmem>>, vector<1x128x128xbf16>
    %54 = vector.shape_cast %53 : vector<1x128x128xbf16> to vector<128x128xbf16>
    %cst_33 = arith.constant dense<0.000000e+00> : vector<16x128xf32>
    %55 = tpu.matmul %52, %54, %cst_33 {dimension_numbers = #tpu.dot_dimension_numbers<[1], [0], [0], [1], [0, 0, 1, 1], [], []>} : vector<16x128xbf16>, vector<128x128xbf16>, vector<16x128xf32> -> vector<16x128xf32>
    %c1_34 = arith.constant 1 : index
    %c0_35 = arith.constant 0 : index
    %c0_36 = arith.constant 0 : index
    %56 = vector.load %arg3[%c1_34, %c0_35, %c0_36] : memref<5x1x128xf32, #tpu.memory_space<vmem>>, vector<1x1x128xf32>
    %57 = vector.shape_cast %56 : vector<1x1x128xf32> to vector<1x128xf32>
    %58 = vector.broadcast %57 : vector<1x128xf32> to vector<16x128xf32>
    %59 = arith.addf %55, %58 : vector<16x128xf32>
    %cst_37 = arith.constant 0.000000e+00 : f32
    %60 = vector.broadcast %cst_37 : f32 to vector<16x128xf32>
    %61 = arith.maximumf %59, %60 : vector<16x128xf32>
    %62 = arith.truncf %61 : vector<16x128xf32> to vector<16x128xbf16>
    %c1_38 = arith.constant 1 : index
    %c0_39 = arith.constant 0 : index
    %c0_40 = arith.constant 0 : index
    %63 = vector.load %arg4[%c1_38, %c0_39, %c0_40] : memref<5x128x128xbf16, #tpu.memory_space<vmem>>, vector<1x128x128xbf16>
    %64 = vector.shape_cast %63 : vector<1x128x128xbf16> to vector<128x128xbf16>
    %cst_41 = arith.constant dense<0.000000e+00> : vector<16x128xf32>
    %65 = tpu.matmul %62, %64, %cst_41 {dimension_numbers = #tpu.dot_dimension_numbers<[1], [0], [0], [1], [0, 0, 1, 1], [], []>} : vector<16x128xbf16>, vector<128x128xbf16>, vector<16x128xf32> -> vector<16x128xf32>
    %c1_42 = arith.constant 1 : index
    %c0_43 = arith.constant 0 : index
    %c0_44 = arith.constant 0 : index
    %66 = vector.load %arg5[%c1_42, %c0_43, %c0_44] : memref<5x1x128xf32, #tpu.memory_space<vmem>>, vector<1x1x128xf32>
    %67 = vector.shape_cast %66 : vector<1x1x128xf32> to vector<1x128xf32>
    %68 = vector.broadcast %67 : vector<1x128xf32> to vector<16x128xf32>
    %69 = arith.addf %65, %68 : vector<16x128xf32>
    %cst_45 = arith.constant 0.000000e+00 : f32
    %70 = vector.broadcast %cst_45 : f32 to vector<16x128xf32>
    %71 = arith.maximumf %69, %70 : vector<16x128xf32>
    %cst_46 = arith.constant dense<0.000000e+00> : vector<128xf32>
    %72 = vector.multi_reduction <add>, %71, %cst_46 [0] : vector<16x128xf32> to vector<128xf32>
    %73 = vector.shape_cast %72 : vector<128xf32> to vector<1x128xf32>
    %cst_47 = arith.constant 1.600000e+01 : f32
    %74 = vector.broadcast %cst_47 : f32 to vector<1x128xf32>
    %75 = arith.divf %73, %74 : vector<1x128xf32>
    %76 = arith.mulf %71, %71 : vector<16x128xf32>
    %cst_48 = arith.constant dense<0.000000e+00> : vector<128xf32>
    %77 = vector.multi_reduction <add>, %76, %cst_48 [0] : vector<16x128xf32> to vector<128xf32>
    %78 = vector.shape_cast %77 : vector<128xf32> to vector<1x128xf32>
    %cst_49 = arith.constant 1.600000e+01 : f32
    %79 = vector.broadcast %cst_49 : f32 to vector<1x128xf32>
    %80 = arith.divf %78, %79 : vector<1x128xf32>
    %81 = arith.mulf %75, %75 : vector<1x128xf32>
    %82 = arith.subf %80, %81 : vector<1x128xf32>
    %83 = vector.broadcast %75 : vector<1x128xf32> to vector<16x128xf32>
    %84 = arith.subf %71, %83 : vector<16x128xf32>
    %cst_50 = arith.constant 9.99999974E-6 : f32
    %85 = vector.broadcast %cst_50 : f32 to vector<1x128xf32>
    %86 = arith.addf %82, %85 : vector<1x128xf32>
    %87 = math.rsqrt %86 : vector<1x128xf32>
    %88 = vector.broadcast %87 : vector<1x128xf32> to vector<16x128xf32>
    %89 = arith.mulf %84, %88 : vector<16x128xf32>
    %c1_51 = arith.constant 1 : index
    %c0_52 = arith.constant 0 : index
    %c0_53 = arith.constant 0 : index
    %90 = vector.load %arg6[%c1_51, %c0_52, %c0_53] : memref<5x1x128xf32, #tpu.memory_space<vmem>>, vector<1x1x128xf32>
    %91 = vector.shape_cast %90 : vector<1x1x128xf32> to vector<1x128xf32>
    %92 = vector.broadcast %91 : vector<1x128xf32> to vector<16x128xf32>
    %93 = arith.mulf %89, %92 : vector<16x128xf32>
    %c1_54 = arith.constant 1 : index
    %c0_55 = arith.constant 0 : index
    %c0_56 = arith.constant 0 : index
    %94 = vector.load %arg7[%c1_54, %c0_55, %c0_56] : memref<5x1x128xf32, #tpu.memory_space<vmem>>, vector<1x1x128xf32>
    %95 = vector.shape_cast %94 : vector<1x1x128xf32> to vector<1x128xf32>
    %96 = vector.broadcast %95 : vector<1x128xf32> to vector<16x128xf32>
    %97 = arith.addf %93, %96 : vector<16x128xf32>
    %98 = arith.truncf %97 : vector<16x128xf32> to vector<16x128xbf16>
    %cst_57 = arith.constant dense<0.000000e+00> : vector<16x128xf32>
    %99 = tpu.matmul %0, %98, %cst_57 {dimension_numbers = #tpu.dot_dimension_numbers<[1], [0], [0], [1], [0, 0, 1, 1], [], []>} : vector<16x16xbf16>, vector<16x128xbf16>, vector<16x128xf32> -> vector<16x128xf32>
    %100 = arith.truncf %99 : vector<16x128xf32> to vector<16x128xbf16>
    %c2 = arith.constant 2 : index
    %c0_58 = arith.constant 0 : index
    %c0_59 = arith.constant 0 : index
    %101 = vector.load %arg2[%c2, %c0_58, %c0_59] : memref<5x128x128xbf16, #tpu.memory_space<vmem>>, vector<1x128x128xbf16>
    %102 = vector.shape_cast %101 : vector<1x128x128xbf16> to vector<128x128xbf16>
    %cst_60 = arith.constant dense<0.000000e+00> : vector<16x128xf32>
    %103 = tpu.matmul %100, %102, %cst_60 {dimension_numbers = #tpu.dot_dimension_numbers<[1], [0], [0], [1], [0, 0, 1, 1], [], []>} : vector<16x128xbf16>, vector<128x128xbf16>, vector<16x128xf32> -> vector<16x128xf32>
    %c2_61 = arith.constant 2 : index
    %c0_62 = arith.constant 0 : index
    %c0_63 = arith.constant 0 : index
    %104 = vector.load %arg3[%c2_61, %c0_62, %c0_63] : memref<5x1x128xf32, #tpu.memory_space<vmem>>, vector<1x1x128xf32>
    %105 = vector.shape_cast %104 : vector<1x1x128xf32> to vector<1x128xf32>
    %106 = vector.broadcast %105 : vector<1x128xf32> to vector<16x128xf32>
    %107 = arith.addf %103, %106 : vector<16x128xf32>
    %cst_64 = arith.constant 0.000000e+00 : f32
    %108 = vector.broadcast %cst_64 : f32 to vector<16x128xf32>
    %109 = arith.maximumf %107, %108 : vector<16x128xf32>
    %110 = arith.truncf %109 : vector<16x128xf32> to vector<16x128xbf16>
    %c2_65 = arith.constant 2 : index
    %c0_66 = arith.constant 0 : index
    %c0_67 = arith.constant 0 : index
    %111 = vector.load %arg4[%c2_65, %c0_66, %c0_67] : memref<5x128x128xbf16, #tpu.memory_space<vmem>>, vector<1x128x128xbf16>
    %112 = vector.shape_cast %111 : vector<1x128x128xbf16> to vector<128x128xbf16>
    %cst_68 = arith.constant dense<0.000000e+00> : vector<16x128xf32>
    %113 = tpu.matmul %110, %112, %cst_68 {dimension_numbers = #tpu.dot_dimension_numbers<[1], [0], [0], [1], [0, 0, 1, 1], [], []>} : vector<16x128xbf16>, vector<128x128xbf16>, vector<16x128xf32> -> vector<16x128xf32>
    %c2_69 = arith.constant 2 : index
    %c0_70 = arith.constant 0 : index
    %c0_71 = arith.constant 0 : index
    %114 = vector.load %arg5[%c2_69, %c0_70, %c0_71] : memref<5x1x128xf32, #tpu.memory_space<vmem>>, vector<1x1x128xf32>
    %115 = vector.shape_cast %114 : vector<1x1x128xf32> to vector<1x128xf32>
    %116 = vector.broadcast %115 : vector<1x128xf32> to vector<16x128xf32>
    %117 = arith.addf %113, %116 : vector<16x128xf32>
    %cst_72 = arith.constant 0.000000e+00 : f32
    %118 = vector.broadcast %cst_72 : f32 to vector<16x128xf32>
    %119 = arith.maximumf %117, %118 : vector<16x128xf32>
    %cst_73 = arith.constant dense<0.000000e+00> : vector<128xf32>
    %120 = vector.multi_reduction <add>, %119, %cst_73 [0] : vector<16x128xf32> to vector<128xf32>
    %121 = vector.shape_cast %120 : vector<128xf32> to vector<1x128xf32>
    %cst_74 = arith.constant 1.600000e+01 : f32
    %122 = vector.broadcast %cst_74 : f32 to vector<1x128xf32>
    %123 = arith.divf %121, %122 : vector<1x128xf32>
    %124 = arith.mulf %119, %119 : vector<16x128xf32>
    %cst_75 = arith.constant dense<0.000000e+00> : vector<128xf32>
    %125 = vector.multi_reduction <add>, %124, %cst_75 [0] : vector<16x128xf32> to vector<128xf32>
    %126 = vector.shape_cast %125 : vector<128xf32> to vector<1x128xf32>
    %cst_76 = arith.constant 1.600000e+01 : f32
    %127 = vector.broadcast %cst_76 : f32 to vector<1x128xf32>
    %128 = arith.divf %126, %127 : vector<1x128xf32>
    %129 = arith.mulf %123, %123 : vector<1x128xf32>
    %130 = arith.subf %128, %129 : vector<1x128xf32>
    %131 = vector.broadcast %123 : vector<1x128xf32> to vector<16x128xf32>
    %132 = arith.subf %119, %131 : vector<16x128xf32>
    %cst_77 = arith.constant 9.99999974E-6 : f32
    %133 = vector.broadcast %cst_77 : f32 to vector<1x128xf32>
    %134 = arith.addf %130, %133 : vector<1x128xf32>
    %135 = math.rsqrt %134 : vector<1x128xf32>
    %136 = vector.broadcast %135 : vector<1x128xf32> to vector<16x128xf32>
    %137 = arith.mulf %132, %136 : vector<16x128xf32>
    %c2_78 = arith.constant 2 : index
    %c0_79 = arith.constant 0 : index
    %c0_80 = arith.constant 0 : index
    %138 = vector.load %arg6[%c2_78, %c0_79, %c0_80] : memref<5x1x128xf32, #tpu.memory_space<vmem>>, vector<1x1x128xf32>
    %139 = vector.shape_cast %138 : vector<1x1x128xf32> to vector<1x128xf32>
    %140 = vector.broadcast %139 : vector<1x128xf32> to vector<16x128xf32>
    %141 = arith.mulf %137, %140 : vector<16x128xf32>
    %c2_81 = arith.constant 2 : index
    %c0_82 = arith.constant 0 : index
    %c0_83 = arith.constant 0 : index
    %142 = vector.load %arg7[%c2_81, %c0_82, %c0_83] : memref<5x1x128xf32, #tpu.memory_space<vmem>>, vector<1x1x128xf32>
    %143 = vector.shape_cast %142 : vector<1x1x128xf32> to vector<1x128xf32>
    %144 = vector.broadcast %143 : vector<1x128xf32> to vector<16x128xf32>
    %145 = arith.addf %141, %144 : vector<16x128xf32>
    %146 = arith.truncf %145 : vector<16x128xf32> to vector<16x128xbf16>
    %cst_84 = arith.constant dense<0.000000e+00> : vector<16x128xf32>
    %147 = tpu.matmul %0, %146, %cst_84 {dimension_numbers = #tpu.dot_dimension_numbers<[1], [0], [0], [1], [0, 0, 1, 1], [], []>} : vector<16x16xbf16>, vector<16x128xbf16>, vector<16x128xf32> -> vector<16x128xf32>
    %148 = arith.truncf %147 : vector<16x128xf32> to vector<16x128xbf16>
    %c3 = arith.constant 3 : index
    %c0_85 = arith.constant 0 : index
    %c0_86 = arith.constant 0 : index
    %149 = vector.load %arg2[%c3, %c0_85, %c0_86] : memref<5x128x128xbf16, #tpu.memory_space<vmem>>, vector<1x128x128xbf16>
    %150 = vector.shape_cast %149 : vector<1x128x128xbf16> to vector<128x128xbf16>
    %cst_87 = arith.constant dense<0.000000e+00> : vector<16x128xf32>
    %151 = tpu.matmul %148, %150, %cst_87 {dimension_numbers = #tpu.dot_dimension_numbers<[1], [0], [0], [1], [0, 0, 1, 1], [], []>} : vector<16x128xbf16>, vector<128x128xbf16>, vector<16x128xf32> -> vector<16x128xf32>
    %c3_88 = arith.constant 3 : index
    %c0_89 = arith.constant 0 : index
    %c0_90 = arith.constant 0 : index
    %152 = vector.load %arg3[%c3_88, %c0_89, %c0_90] : memref<5x1x128xf32, #tpu.memory_space<vmem>>, vector<1x1x128xf32>
    %153 = vector.shape_cast %152 : vector<1x1x128xf32> to vector<1x128xf32>
    %154 = vector.broadcast %153 : vector<1x128xf32> to vector<16x128xf32>
    %155 = arith.addf %151, %154 : vector<16x128xf32>
    %cst_91 = arith.constant 0.000000e+00 : f32
    %156 = vector.broadcast %cst_91 : f32 to vector<16x128xf32>
    %157 = arith.maximumf %155, %156 : vector<16x128xf32>
    %158 = arith.truncf %157 : vector<16x128xf32> to vector<16x128xbf16>
    %c3_92 = arith.constant 3 : index
    %c0_93 = arith.constant 0 : index
    %c0_94 = arith.constant 0 : index
    %159 = vector.load %arg4[%c3_92, %c0_93, %c0_94] : memref<5x128x128xbf16, #tpu.memory_space<vmem>>, vector<1x128x128xbf16>
    %160 = vector.shape_cast %159 : vector<1x128x128xbf16> to vector<128x128xbf16>
    %cst_95 = arith.constant dense<0.000000e+00> : vector<16x128xf32>
    %161 = tpu.matmul %158, %160, %cst_95 {dimension_numbers = #tpu.dot_dimension_numbers<[1], [0], [0], [1], [0, 0, 1, 1], [], []>} : vector<16x128xbf16>, vector<128x128xbf16>, vector<16x128xf32> -> vector<16x128xf32>
    %c3_96 = arith.constant 3 : index
    %c0_97 = arith.constant 0 : index
    %c0_98 = arith.constant 0 : index
    %162 = vector.load %arg5[%c3_96, %c0_97, %c0_98] : memref<5x1x128xf32, #tpu.memory_space<vmem>>, vector<1x1x128xf32>
    %163 = vector.shape_cast %162 : vector<1x1x128xf32> to vector<1x128xf32>
    %164 = vector.broadcast %163 : vector<1x128xf32> to vector<16x128xf32>
    %165 = arith.addf %161, %164 : vector<16x128xf32>
    %cst_99 = arith.constant 0.000000e+00 : f32
    %166 = vector.broadcast %cst_99 : f32 to vector<16x128xf32>
    %167 = arith.maximumf %165, %166 : vector<16x128xf32>
    %cst_100 = arith.constant dense<0.000000e+00> : vector<128xf32>
    %168 = vector.multi_reduction <add>, %167, %cst_100 [0] : vector<16x128xf32> to vector<128xf32>
    %169 = vector.shape_cast %168 : vector<128xf32> to vector<1x128xf32>
    %cst_101 = arith.constant 1.600000e+01 : f32
    %170 = vector.broadcast %cst_101 : f32 to vector<1x128xf32>
    %171 = arith.divf %169, %170 : vector<1x128xf32>
    %172 = arith.mulf %167, %167 : vector<16x128xf32>
    %cst_102 = arith.constant dense<0.000000e+00> : vector<128xf32>
    %173 = vector.multi_reduction <add>, %172, %cst_102 [0] : vector<16x128xf32> to vector<128xf32>
    %174 = vector.shape_cast %173 : vector<128xf32> to vector<1x128xf32>
    %cst_103 = arith.constant 1.600000e+01 : f32
    %175 = vector.broadcast %cst_103 : f32 to vector<1x128xf32>
    %176 = arith.divf %174, %175 : vector<1x128xf32>
    %177 = arith.mulf %171, %171 : vector<1x128xf32>
    %178 = arith.subf %176, %177 : vector<1x128xf32>
    %179 = vector.broadcast %171 : vector<1x128xf32> to vector<16x128xf32>
    %180 = arith.subf %167, %179 : vector<16x128xf32>
    %cst_104 = arith.constant 9.99999974E-6 : f32
    %181 = vector.broadcast %cst_104 : f32 to vector<1x128xf32>
    %182 = arith.addf %178, %181 : vector<1x128xf32>
    %183 = math.rsqrt %182 : vector<1x128xf32>
    %184 = vector.broadcast %183 : vector<1x128xf32> to vector<16x128xf32>
    %185 = arith.mulf %180, %184 : vector<16x128xf32>
    %c3_105 = arith.constant 3 : index
    %c0_106 = arith.constant 0 : index
    %c0_107 = arith.constant 0 : index
    %186 = vector.load %arg6[%c3_105, %c0_106, %c0_107] : memref<5x1x128xf32, #tpu.memory_space<vmem>>, vector<1x1x128xf32>
    %187 = vector.shape_cast %186 : vector<1x1x128xf32> to vector<1x128xf32>
    %188 = vector.broadcast %187 : vector<1x128xf32> to vector<16x128xf32>
    %189 = arith.mulf %185, %188 : vector<16x128xf32>
    %c3_108 = arith.constant 3 : index
    %c0_109 = arith.constant 0 : index
    %c0_110 = arith.constant 0 : index
    %190 = vector.load %arg7[%c3_108, %c0_109, %c0_110] : memref<5x1x128xf32, #tpu.memory_space<vmem>>, vector<1x1x128xf32>
    %191 = vector.shape_cast %190 : vector<1x1x128xf32> to vector<1x128xf32>
    %192 = vector.broadcast %191 : vector<1x128xf32> to vector<16x128xf32>
    %193 = arith.addf %189, %192 : vector<16x128xf32>
    %194 = arith.truncf %193 : vector<16x128xf32> to vector<16x128xbf16>
    %cst_111 = arith.constant dense<0.000000e+00> : vector<16x128xf32>
    %195 = tpu.matmul %0, %194, %cst_111 {dimension_numbers = #tpu.dot_dimension_numbers<[1], [0], [0], [1], [0, 0, 1, 1], [], []>} : vector<16x16xbf16>, vector<16x128xbf16>, vector<16x128xf32> -> vector<16x128xf32>
    %196 = arith.truncf %195 : vector<16x128xf32> to vector<16x128xbf16>
    %c4 = arith.constant 4 : index
    %c0_112 = arith.constant 0 : index
    %c0_113 = arith.constant 0 : index
    %197 = vector.load %arg2[%c4, %c0_112, %c0_113] : memref<5x128x128xbf16, #tpu.memory_space<vmem>>, vector<1x128x128xbf16>
    %198 = vector.shape_cast %197 : vector<1x128x128xbf16> to vector<128x128xbf16>
    %cst_114 = arith.constant dense<0.000000e+00> : vector<16x128xf32>
    %199 = tpu.matmul %196, %198, %cst_114 {dimension_numbers = #tpu.dot_dimension_numbers<[1], [0], [0], [1], [0, 0, 1, 1], [], []>} : vector<16x128xbf16>, vector<128x128xbf16>, vector<16x128xf32> -> vector<16x128xf32>
    %c4_115 = arith.constant 4 : index
    %c0_116 = arith.constant 0 : index
    %c0_117 = arith.constant 0 : index
    %200 = vector.load %arg3[%c4_115, %c0_116, %c0_117] : memref<5x1x128xf32, #tpu.memory_space<vmem>>, vector<1x1x128xf32>
    %201 = vector.shape_cast %200 : vector<1x1x128xf32> to vector<1x128xf32>
    %202 = vector.broadcast %201 : vector<1x128xf32> to vector<16x128xf32>
    %203 = arith.addf %199, %202 : vector<16x128xf32>
    %cst_118 = arith.constant 0.000000e+00 : f32
    %204 = vector.broadcast %cst_118 : f32 to vector<16x128xf32>
    %205 = arith.maximumf %203, %204 : vector<16x128xf32>
    %206 = arith.truncf %205 : vector<16x128xf32> to vector<16x128xbf16>
    %c4_119 = arith.constant 4 : index
    %c0_120 = arith.constant 0 : index
    %c0_121 = arith.constant 0 : index
    %207 = vector.load %arg4[%c4_119, %c0_120, %c0_121] : memref<5x128x128xbf16, #tpu.memory_space<vmem>>, vector<1x128x128xbf16>
    %208 = vector.shape_cast %207 : vector<1x128x128xbf16> to vector<128x128xbf16>
    %cst_122 = arith.constant dense<0.000000e+00> : vector<16x128xf32>
    %209 = tpu.matmul %206, %208, %cst_122 {dimension_numbers = #tpu.dot_dimension_numbers<[1], [0], [0], [1], [0, 0, 1, 1], [], []>} : vector<16x128xbf16>, vector<128x128xbf16>, vector<16x128xf32> -> vector<16x128xf32>
    %c4_123 = arith.constant 4 : index
    %c0_124 = arith.constant 0 : index
    %c0_125 = arith.constant 0 : index
    %210 = vector.load %arg5[%c4_123, %c0_124, %c0_125] : memref<5x1x128xf32, #tpu.memory_space<vmem>>, vector<1x1x128xf32>
    %211 = vector.shape_cast %210 : vector<1x1x128xf32> to vector<1x128xf32>
    %212 = vector.broadcast %211 : vector<1x128xf32> to vector<16x128xf32>
    %213 = arith.addf %209, %212 : vector<16x128xf32>
    %cst_126 = arith.constant 0.000000e+00 : f32
    %214 = vector.broadcast %cst_126 : f32 to vector<16x128xf32>
    %215 = arith.maximumf %213, %214 : vector<16x128xf32>
    %cst_127 = arith.constant dense<0.000000e+00> : vector<128xf32>
    %216 = vector.multi_reduction <add>, %215, %cst_127 [0] : vector<16x128xf32> to vector<128xf32>
    %217 = vector.shape_cast %216 : vector<128xf32> to vector<1x128xf32>
    %cst_128 = arith.constant 1.600000e+01 : f32
    %218 = vector.broadcast %cst_128 : f32 to vector<1x128xf32>
    %219 = arith.divf %217, %218 : vector<1x128xf32>
    %220 = arith.mulf %215, %215 : vector<16x128xf32>
    %cst_129 = arith.constant dense<0.000000e+00> : vector<128xf32>
    %221 = vector.multi_reduction <add>, %220, %cst_129 [0] : vector<16x128xf32> to vector<128xf32>
    %222 = vector.shape_cast %221 : vector<128xf32> to vector<1x128xf32>
    %cst_130 = arith.constant 1.600000e+01 : f32
    %223 = vector.broadcast %cst_130 : f32 to vector<1x128xf32>
    %224 = arith.divf %222, %223 : vector<1x128xf32>
    %225 = arith.mulf %219, %219 : vector<1x128xf32>
    %226 = arith.subf %224, %225 : vector<1x128xf32>
    %227 = vector.broadcast %219 : vector<1x128xf32> to vector<16x128xf32>
    %228 = arith.subf %215, %227 : vector<16x128xf32>
    %cst_131 = arith.constant 9.99999974E-6 : f32
    %229 = vector.broadcast %cst_131 : f32 to vector<1x128xf32>
    %230 = arith.addf %226, %229 : vector<1x128xf32>
    %231 = math.rsqrt %230 : vector<1x128xf32>
    %232 = vector.broadcast %231 : vector<1x128xf32> to vector<16x128xf32>
    %233 = arith.mulf %228, %232 : vector<16x128xf32>
    %c4_132 = arith.constant 4 : index
    %c0_133 = arith.constant 0 : index
    %c0_134 = arith.constant 0 : index
    %234 = vector.load %arg6[%c4_132, %c0_133, %c0_134] : memref<5x1x128xf32, #tpu.memory_space<vmem>>, vector<1x1x128xf32>
    %235 = vector.shape_cast %234 : vector<1x1x128xf32> to vector<1x128xf32>
    %236 = vector.broadcast %235 : vector<1x128xf32> to vector<16x128xf32>
    %237 = arith.mulf %233, %236 : vector<16x128xf32>
    %c4_135 = arith.constant 4 : index
    %c0_136 = arith.constant 0 : index
    %c0_137 = arith.constant 0 : index
    %238 = vector.load %arg7[%c4_135, %c0_136, %c0_137] : memref<5x1x128xf32, #tpu.memory_space<vmem>>, vector<1x1x128xf32>
    %239 = vector.shape_cast %238 : vector<1x1x128xf32> to vector<1x128xf32>
    %240 = vector.broadcast %239 : vector<1x128xf32> to vector<16x128xf32>
    %241 = arith.addf %237, %240 : vector<16x128xf32>
    %c0_138 = arith.constant 0 : index
    %c0_139 = arith.constant 0 : index
    %242 = vector.load %arg8[%c0_138, %c0_139] : memref<2x16xbf16, #tpu.memory_space<vmem>>, vector<2x16xbf16>
    %243 = arith.truncf %241 : vector<16x128xf32> to vector<16x128xbf16>
    %cst_140 = arith.constant dense<0.000000e+00> : vector<2x128xf32>
    %244 = tpu.matmul %242, %243, %cst_140 {dimension_numbers = #tpu.dot_dimension_numbers<[1], [0], [0], [1], [0, 0, 1, 1], [], []>} : vector<2x16xbf16>, vector<16x128xbf16>, vector<2x128xf32> -> vector<2x128xf32>
    %245 = arith.truncf %244 : vector<2x128xf32> to vector<2x128xbf16>
    %c0_141 = arith.constant 0 : index
    %c0_142 = arith.constant 0 : index
    %246 = vector.load %arg9[%c0_141, %c0_142] : memref<128x128xbf16, #tpu.memory_space<vmem>>, vector<128x128xbf16>
    %cst_143 = arith.constant dense<0.000000e+00> : vector<2x128xf32>
    %247 = tpu.matmul %245, %246, %cst_143 {dimension_numbers = #tpu.dot_dimension_numbers<[1], [0], [0], [1], [0, 0, 1, 1], [], []>} : vector<2x128xbf16>, vector<128x128xbf16>, vector<2x128xf32> -> vector<2x128xf32>
    %c0_144 = arith.constant 0 : index
    %c0_145 = arith.constant 0 : index
    %248 = vector.load %arg10[%c0_144, %c0_145] : memref<1x128xf32, #tpu.memory_space<vmem>>, vector<1x128xf32>
    %249 = vector.broadcast %248 : vector<1x128xf32> to vector<2x128xf32>
    %250 = arith.addf %247, %249 : vector<2x128xf32>
    %cst_146 = arith.constant 0.000000e+00 : f32
    %251 = vector.broadcast %cst_146 : f32 to vector<2x128xf32>
    %252 = arith.maximumf %250, %251 : vector<2x128xf32>
    %253 = arith.truncf %252 : vector<2x128xf32> to vector<2x128xbf16>
    %c0_147 = arith.constant 0 : index
    %c0_148 = arith.constant 0 : index
    %254 = vector.load %arg11[%c0_147, %c0_148] : memref<128x128xbf16, #tpu.memory_space<vmem>>, vector<128x128xbf16>
    %cst_149 = arith.constant dense<0.000000e+00> : vector<2x128xf32>
    %255 = tpu.matmul %253, %254, %cst_149 {dimension_numbers = #tpu.dot_dimension_numbers<[1], [0], [0], [1], [0, 0, 1, 1], [], []>} : vector<2x128xbf16>, vector<128x128xbf16>, vector<2x128xf32> -> vector<2x128xf32>
    %c0_150 = arith.constant 0 : index
    %c0_151 = arith.constant 0 : index
    %256 = vector.load %arg12[%c0_150, %c0_151] : memref<1x128xf32, #tpu.memory_space<vmem>>, vector<1x128xf32>
    %257 = vector.broadcast %256 : vector<1x128xf32> to vector<2x128xf32>
    %258 = arith.addf %255, %257 : vector<2x128xf32>
    %cst_152 = arith.constant dense<0xFF800000> : vector<2xf32>
    %259 = vector.multi_reduction <maximumf>, %258, %cst_152 [1] : vector<2x128xf32> to vector<2xf32>
    %260 = vector.shape_cast %259 : vector<2xf32> to vector<2x1xf32>
    %261 = vector.broadcast %260 : vector<2x1xf32> to vector<2x128xf32>
    %262 = arith.subf %258, %261 : vector<2x128xf32>
    %263 = math.exp %262 : vector<2x128xf32>
    %cst_153 = arith.constant dense<0.000000e+00> : vector<2xf32>
    %264 = vector.multi_reduction <add>, %263, %cst_153 [1] : vector<2x128xf32> to vector<2xf32>
    %265 = vector.shape_cast %264 : vector<2xf32> to vector<2x1xf32>
    %266 = math.log %265 : vector<2x1xf32>
    %267 = vector.broadcast %266 : vector<2x1xf32> to vector<2x128xf32>
    %268 = arith.subf %262, %267 : vector<2x128xf32>
    %c0_154 = arith.constant 0 : index
    %c0_155 = arith.constant 0 : index
    %269 = vector.load %arg13[%c0_154, %c0_155] : memref<2x128xf32, #tpu.memory_space<vmem>>, vector<2x128xf32>
    tpu.vector_store %arg13[%c0_154, %c0_155], %268 {strides = array<i32>} : memref<2x128xf32, #tpu.memory_space<vmem>>, vector<2x128xf32>,
    return
  }
}

</mosaic_0001>

<llo_original>
// kernel: tpu_custom_call.1
$region0: #{tpu_custom_call.1}
  #allocation0 [shape = 'u32[]', space=smem, size = 0x4, offset = 0x4, fixed_abs, tag = 'smem constant byte address 0x4 - core index']
  #allocation1 [shape = 'u32[144,128]{1,0:T(1,128)}', space=vmem, size = 0x12000, scoped, tag = 'internal scratch']
  %s0 = inlined_call_operand.hbm [shape: bf16[16,16], index: 0, kind: input, shape index: {}]
  %s1 = inlined_call_operand.hbm [shape: f32[16,128], index: 1, kind: input, shape index: {}]
  %s2 = inlined_call_operand.hbm [shape: bf16[5,128,128], index: 2, kind: input, shape index: {}]
  %s3 = inlined_call_operand.vmem [shape: f32[5,1,128], index: 3, kind: input, shape index: {}]
  %s4 = inlined_call_operand.hbm [shape: bf16[5,128,128], index: 4, kind: input, shape index: {}]
  %s5 = inlined_call_operand.vmem [shape: f32[5,1,128], index: 5, kind: input, shape index: {}]
  %s6 = inlined_call_operand.vmem [shape: f32[5,1,128], index: 6, kind: input, shape index: {}]
  %s7 = inlined_call_operand.vmem [shape: f32[5,1,128], index: 7, kind: input, shape index: {}]
  %s8 = inlined_call_operand.vmem [shape: bf16[2,16], index: 8, kind: input, shape index: {}]
  %s9 = inlined_call_operand.hbm [shape: bf16[128,128], index: 9, kind: input, shape index: {}]
  %s10 = inlined_call_operand.vmem [shape: f32[1,128], index: 10, kind: input, shape index: {}]
  %s11 = inlined_call_operand.hbm [shape: bf16[128,128], index: 11, kind: input, shape index: {}]
  %s12 = inlined_call_operand.vmem [shape: f32[1,128], index: 12, kind: input, shape index: {}]
  %s13 = inlined_call_operand.hbm [shape: f32[2,128], index: 13, kind: output, shape index: {}]
  %s14 = sld [smem:[#allocation0]]
  $region86: #{tpu_custom_call.1} parent=0
    _
  %s16 = ssub.s32 1, %s14
  %s17 = scalar_select 0, %s16, %s14
  $region1: #{tpu_custom_call.1} parent=0
    #allocation2 [shape = 'u8[4096]{0}', space=vmem, size = 0x1000, scoped, tag = 'input window, operand 0, single buffered']
    #allocation3 [shape = 's32[1]{0}', space=sflag, size = 0x4, scoped, tag = 'scoped memory for tpu_custom_call.1']
    #allocation4 [shape = 's32[1]{0}', space=sflag, size = 0x4, scoped, tag = 'scoped memory for tpu_custom_call.1']
    #allocation5 [shape = 'u8[8192]{0}', space=vmem, size = 0x2000, scoped, tag = 'input window, operand 1, single buffered']
    #allocation6 [shape = 's32[1]{0}', space=sflag, size = 0x4, scoped, tag = 'scoped memory for tpu_custom_call.1']
    #allocation7 [shape = 'u8[163840]{0}', space=vmem, size = 0x28000, scoped, tag = 'input window, operand 2, single buffered']
    #allocation8 [shape = 'u8[163840]{0}', space=vmem, size = 0x28000, scoped, tag = 'input window, operand 4, single buffered']
    #allocation9 [shape = 's32[1]{0}', space=sflag, size = 0x4, scoped, tag = 'scoped memory for tpu_custom_call.1']
    #allocation10 [shape = 'u8[32768]{0}', space=vmem, size = 0x8000, scoped, tag = 'input window, operand 9, single buffered']
    #allocation11 [shape = 'u8[32768]{0}', space=vmem, size = 0x8000, scoped, tag = 'input window, operand 11, single buffered']
    #allocation12 [shape = 's32[1]{0}', space=sflag, size = 0x4, scoped, tag = 'scoped memory for tpu_custom_call.1']
    #allocation13 [shape = 'u8[1024]{0}', space=vmem, size = 0x400, scoped, tag = 'output window, operand 0, single buffered']
    %18 = vsyncpa [#allocation3], 0
    %19 = vsyncpa [#allocation6], 0
    %20 = vsyncpa [#allocation9], 0
    %21 = vsyncpa [#allocation12], 0
    %22 = vsyncpa [#allocation4], 0
    // Predicated region
    $region2: #{tpu_custom_call.1} parent=1 // pred_check
      _
    $region3: #{tpu_custom_call.1} parent=1 // pred_check_branch
      %24 = sbr.rel (0) target = $region5
    $region4: #{tpu_custom_call.1} parent=1 // pred_region
      %s26 = ssub.s32 128, 128
      %27 = vsyncadd [#allocation3], %s26
      %s28 = sshll.u32 [#allocation2], 4
      %s29 = int_to_ptr.vmem [resolvable:$true] %s28
      %34 = dma.hbm_to_vmem [thread:$0]  %s0, 128, %s29, [#allocation3], 64, 64, 4
    $region5: #{tpu_custom_call.1} parent=1 // pred_fallthru
      _
    // Predicated region
    $region6: #{tpu_custom_call.1} parent=1 // pred_check
      _
    $region7: #{tpu_custom_call.1} parent=1 // pred_check_branch
      %36 = sbr.rel (0) target = $region9
    $region8: #{tpu_custom_call.1} parent=1 // pred_region
      %s38 = ssub.s32 256, 256
      %39 = vsyncadd [#allocation6], %s38
      %s40 = sshll.u32 [#allocation5], 4
      %s41 = int_to_ptr.vmem [resolvable:$true] %s40
      %46 = dma.hbm_to_vmem [thread:$0]  %s1, 256, %s41, [#allocation6], 128, 128, 8
    $region9: #{tpu_custom_call.1} parent=1 // pred_fallthru
      _
    // Predicated region
    $region10: #{tpu_custom_call.1} parent=1 // pred_check
      _
    $region11: #{tpu_custom_call.1} parent=1 // pred_check_branch
      %48 = sbr.rel (0) target = $region13
    $region12: #{tpu_custom_call.1} parent=1 // pred_region
      %s50 = ssub.s32 5120, 5120
      %51 = vsyncadd [#allocation6], %s50
      %s52 = sshll.u32 [#allocation7], 4
      %s53 = int_to_ptr.vmem [resolvable:$true] %s52
      %58 = dma.hbm_to_vmem [thread:$0]  %s2, 5120, %s53, [#allocation6], 64, 64, 4
    $region13: #{tpu_custom_call.1} parent=1 // pred_fallthru
      _
    // Predicated region
    $region14: #{tpu_custom_call.1} parent=1 // pred_check
      _
    $region15: #{tpu_custom_call.1} parent=1 // pred_check_branch
      %60 = sbr.rel (0) target = $region17
    $region16: #{tpu_custom_call.1} parent=1 // pred_region
      _
    $region17: #{tpu_custom_call.1} parent=1 // pred_fallthru
      _
    // Predicated region
    $region18: #{tpu_custom_call.1} parent=1 // pred_check
      _
    $region19: #{tpu_custom_call.1} parent=1 // pred_check_branch
      %62 = sbr.rel (0) target = $region21
    $region20: #{tpu_custom_call.1} parent=1 // pred_region
      %s64 = ssub.s32 5120, 5120
      %65 = vsyncadd [#allocation9], %s64
      %s66 = sshll.u32 [#allocation8], 4
      %s67 = int_to_ptr.vmem [resolvable:$true] %s66
      %72 = dma.hbm_to_vmem [thread:$0]  %s4, 5120, %s67, [#allocation9], 64, 64, 4
    $region21: #{tpu_custom_call.1} parent=1 // pred_fallthru
      _
    // Predicated region
    $region22: #{tpu_custom_call.1} parent=1 // pred_check
      _
    $region23: #{tpu_custom_call.1} parent=1 // pred_check_branch
      %74 = sbr.rel (0) target = $region25
    $region24: #{tpu_custom_call.1} parent=1 // pred_region
      _
    $region25: #{tpu_custom_call.1} parent=1 // pred_fallthru
      _
    // Predicated region
    $region26: #{tpu_custom_call.1} parent=1 // pred_check
      _
    $region27: #{tpu_custom_call.1} parent=1 // pred_check_branch
      %76 = sbr.rel (0) target = $region29
    $region28: #{tpu_custom_call.1} parent=1 // pred_region
      _
    $region29: #{tpu_custom_call.1} parent=1 // pred_fallthru
      _
    // Predicated region
    $region30: #{tpu_custom_call.1} parent=1 // pred_check
      _
    $region31: #{tpu_custom_call.1} parent=1 // pred_check_branch
      %78 = sbr.rel (0) target = $region33
    $region32: #{tpu_custom_call.1} parent=1 // pred_region
      _
    $region33: #{tpu_custom_call.1} parent=1 // pred_fallthru
      _
    // Predicated region
    $region34: #{tpu_custom_call.1} parent=1 // pred_check
      _
    $region35: #{tpu_custom_call.1} parent=1 // pred_check_branch
      %80 = sbr.rel (0) target = $region37
    $region36: #{tpu_custom_call.1} parent=1 // pred_region
      _
    $region37: #{tpu_custom_call.1} parent=1 // pred_fallthru
      _
    // Predicated region
    $region38: #{tpu_custom_call.1} parent=1 // pred_check
      _
    $region39: #{tpu_custom_call.1} parent=1 // pred_check_branch
      %82 = sbr.rel (0) target = $region41
    $region40: #{tpu_custom_call.1} parent=1 // pred_region
      %s84 = ssub.s32 1024, 1024
      %85 = vsyncadd [#allocation9], %s84
      %s86 = sshll.u32 [#allocation10], 4
      %s87 = int_to_ptr.vmem [resolvable:$true] %s86
      %92 = dma.hbm_to_vmem [thread:$0]  %s9, 1024, %s87, [#allocation9], 64, 64, 4
    $region41: #{tpu_custom_call.1} parent=1 // pred_fallthru
      _
    // Predicated region
    $region42: #{tpu_custom_call.1} parent=1 // pred_check
      _
    $region43: #{tpu_custom_call.1} parent=1 // pred_check_branch
      %94 = sbr.rel (0) target = $region45
    $region44: #{tpu_custom_call.1} parent=1 // pred_region
      _
    $region45: #{tpu_custom_call.1} parent=1 // pred_fallthru
      _
    // Predicated region
    $region46: #{tpu_custom_call.1} parent=1 // pred_check
      _
    $region47: #{tpu_custom_call.1} parent=1 // pred_check_branch
      %96 = sbr.rel (0) target = $region49
    $region48: #{tpu_custom_call.1} parent=1 // pred_region
      %s98 = ssub.s32 1024, 1024
      %99 = vsyncadd [#allocation12], %s98
      %s100 = sshll.u32 [#allocation11], 4
      %s101 = int_to_ptr.vmem [resolvable:$true] %s100
      %106 = dma.hbm_to_vmem [thread:$0]  %s11, 1024, %s101, [#allocation12], 64, 64, 4
    $region49: #{tpu_custom_call.1} parent=1 // pred_fallthru
      _
    // Predicated region
    $region50: #{tpu_custom_call.1} parent=1 // pred_check
      _
    $region51: #{tpu_custom_call.1} parent=1 // pred_check_branch
      %108 = sbr.rel (0) target = $region53
    $region52: #{tpu_custom_call.1} parent=1 // pred_region
      _
    $region53: #{tpu_custom_call.1} parent=1 // pred_fallthru
      _
    // Predicated region
    $region54: #{tpu_custom_call.1} parent=1 // pred_check
      _
    $region55: #{tpu_custom_call.1} parent=1 // pred_check_branch
      %110 = sbr.rel (0) target = $region57
    $region56: #{tpu_custom_call.1} parent=1 // pred_region
      %111 = dma.done [#allocation3], 128
    $region57: #{tpu_custom_call.1} parent=1 // pred_fallthru
      _
    // Predicated region
    $region58: #{tpu_custom_call.1} parent=1 // pred_check
      _
    $region59: #{tpu_custom_call.1} parent=1 // pred_check_branch
      %113 = sbr.rel (0) target = $region61
    $region60: #{tpu_custom_call.1} parent=1 // pred_region
      %114 = dma.done [#allocation6], 256
    $region61: #{tpu_custom_call.1} parent=1 // pred_fallthru
      _
    // Predicated region
    $region62: #{tpu_custom_call.1} parent=1 // pred_check
      _
    $region63: #{tpu_custom_call.1} parent=1 // pred_check_branch
      %116 = sbr.rel (0) target = $region65
    $region64: #{tpu_custom_call.1} parent=1 // pred_region
      %117 = dma.done [#allocation6], 5120
    $region65: #{tpu_custom_call.1} parent=1 // pred_fallthru
      _
    // Predicated region
    $region66: #{tpu_custom_call.1} parent=1 // pred_check
      _
    $region67: #{tpu_custom_call.1} parent=1 // pred_check_branch
      %119 = sbr.rel (0) target = $region69
    $region68: #{tpu_custom_call.1} parent=1 // pred_region
      %120 = dma.done [#allocation9], 5120
    $region69: #{tpu_custom_call.1} parent=1 // pred_fallthru
      _
    // Predicated region
    $region70: #{tpu_custom_call.1} parent=1 // pred_check
      _
    $region71: #{tpu_custom_call.1} parent=1 // pred_check_branch
      %122 = sbr.rel (0) target = $region73
    $region72: #{tpu_custom_call.1} parent=1 // pred_region
      %123 = dma.done [#allocation9], 1024
    $region73: #{tpu_custom_call.1} parent=1 // pred_fallthru
      _
    // Predicated region
    $region74: #{tpu_custom_call.1} parent=1 // pred_check
      _
    $region75: #{tpu_custom_call.1} parent=1 // pred_check_branch
      %125 = sbr.rel (0) target = $region77
    $region76: #{tpu_custom_call.1} parent=1 // pred_region
      %126 = dma.done [#allocation12], 1024
    $region77: #{tpu_custom_call.1} parent=1 // pred_fallthru
      _
    %v128 = vld [vmem:[#allocation2] sm:$0xf]
    %v129 = vld [vmem:[#allocation2 + $0x4] sm:$0xf]
    %v130 = vld [vmem:[#allocation5] sm:$0xff]
    %v131 = vld [vmem:[#allocation5 + $0x8] sm:$0xff]
    %v132 = vpack.c.bf16 %v131, %v130
    %v135 = vunpack.c.l.b16 %v128
    %v136 = vunpack.c.l.b16 %v129
    %v137 = vpack.c.b16 %v136, %v135
    %vm138 = vcmask 130048
    %v140 = vsel %vm138, %v137, 0
    %142 = vmatprep.subr.bf16.mxu0 0
    %143 = vmatpush1.bf16.msra.mxu0 %v132
    %144 = vmatprep.subr.bf16.mxu0 0
    %145 = vmatpush1.bf16.msra.mxu0 0
    %146 = vmatprep.subr.bf16.mxu0 0
    %147 = vmatpush1.bf16.msra.mxu0 0
    %148 = vmatprep.subr.bf16.mxu0 0
    %149 = vmatpush1.bf16.msra.mxu0 0
    %150 = vmatprep.subr.bf16.mxu0 0
    %151 = vmatpush1.bf16.msra.mxu0 0
    %152 = vmatprep.subr.bf16.mxu0 0
    %153 = vmatpush1.bf16.msra.mxu0 0
    %154 = vmatprep.subr.bf16.mxu0 0
    %155 = vmatpush1.bf16.msra.mxu0 0
    %156 = vmatprep.subr.bf16.mxu0 0
    %157 = vmatpush1.bf16.msra.mxu0 0
    %158 = vmatprep.subr.bf16.mxu0 0
    %159 = vmatpush1.bf16.msra.mxu0 0
    %160 = vmatprep.subr.bf16.mxu0 0
    %161 = vmatpush1.bf16.msra.mxu0 0
    %162 = vmatprep.subr.bf16.mxu0 0
    %163 = vmatpush1.bf16.msra.mxu0 0
    %164 = vmatprep.subr.bf16.mxu0 0
    %165 = vmatpush1.bf16.msra.mxu0 0
    %166 = vmatprep.subr.bf16.mxu0 0
    %167 = vmatpush1.bf16.msra.mxu0 0
    %168 = vmatprep.subr.bf16.mxu0 0
    %169 = vmatpush1.bf16.msra.mxu0 0
    %170 = vmatprep.subr.bf16.mxu0 0
    %171 = vmatpush1.bf16.msra.mxu0 0
    %172 = vmatprep.subr.bf16.mxu0 0
    %173 = vmatpush1.bf16.msra.mxu0 0
    %174 = vmatprep.mubr.bf16.mxu0 0
    %175 = vmatmul.mubr.bf16.gmra.mrb[0].mxu0 %v140
    %v176 = vpop.f32.mrb[0].mxu0
    %v177 = vadd.f32 0.0, %v176
    %v178 = vpop.f32.mrb[0].mxu0
    %v179 = vpop.f32.mrb[0].mxu0
    %v180 = vadd.f32 0.0, %v179
    %v181 = vpop.f32.mrb[0].mxu0
    %182 = vdwg.mxu0
    %v183 = vpack.c.bf16 %v180, %v177
    %v184 = vld [vmem:[#allocation7] sm:$0xf]
    %v185 = vld [vmem:[#allocation7 + $0x4] sm:$0xf]
    %v186 = vld [vmem:[#allocation7 + $0x8] sm:$0xf]
    %v187 = vld [vmem:[#allocation7 + $0xc] sm:$0xf]
    %v188 = vld [vmem:[#allocation7 + $0x10] sm:$0xf]
    %v189 = vld [vmem:[#allocation7 + $0x14] sm:$0xf]
    %v190 = vld [vmem:[#allocation7 + $0x18] sm:$0xf]
    %v191 = vld [vmem:[#allocation7 + $0x1c] sm:$0xf]
    %v192 = vld [vmem:[#allocation7 + $0x20] sm:$0xf]
    %v193 = vld [vmem:[#allocation7 + $0x24] sm:$0xf]
    %v194 = vld [vmem:[#allocation7 + $0x28] sm:$0xf]
    %v195 = vld [vmem:[#allocation7 + $0x2c] sm:$0xf]
    %v196 = vld [vmem:[#allocation7 + $0x30] sm:$0xf]
    %v197 = vld [vmem:[#allocation7 + $0x34] sm:$0xf]
    %v198 = vld [vmem:[#allocation7 + $0x38] sm:$0xf]
    %v199 = vld [vmem:[#allocation7 + $0x3c] sm:$0xf]
    %v200 = vld [vmem:[%s3] sm:$0x1]
    %v202 = vlaneseq
    %v203 = vshrl.u32 %v202, 7
    %v204 = vsub.s32 0, %v203
    %v205 = vrot.slane %v200, %v204
    %v223 = vunpack.c.l.b16 %v184
    %v224 = vunpack.c.l.b16 %v185
    %v225 = vunpack.c.l.b16 %v186
    %v226 = vunpack.c.l.b16 %v187
    %v227 = vunpack.c.l.b16 %v188
    %v228 = vunpack.c.l.b16 %v189
    %v229 = vunpack.c.l.b16 %v190
    %v230 = vunpack.c.l.b16 %v191
    %v231 = vunpack.c.l.b16 %v192
    %v232 = vunpack.c.l.b16 %v193
    %v233 = vunpack.c.l.b16 %v194
    %v234 = vunpack.c.l.b16 %v195
    %v235 = vunpack.c.l.b16 %v196
    %v236 = vunpack.c.l.b16 %v197
    %v237 = vunpack.c.l.b16 %v198
    %v238 = vunpack.c.l.b16 %v199
    %v239 = vpack.c.b16 %v224, %v223
    %v240 = vpack.c.b16 %v226, %v225
    %v241 = vpack.c.b16 %v228, %v227
    %v242 = vpack.c.b16 %v230, %v229
    %v243 = vpack.c.b16 %v232, %v231
    %v244 = vpack.c.b16 %v234, %v233
    %v245 = vpack.c.b16 %v236, %v235
    %v246 = vpack.c.b16 %v238, %v237
    %255 = vmatprep.subr.bf16.mxu0 0
    %256 = vmatpush1.bf16.msra.mxu0 %v239
    %257 = vmatprep.subr.bf16.mxu0 0
    %258 = vmatpush1.bf16.msra.mxu0 %v240
    %259 = vmatprep.subr.bf16.mxu0 0
    %260 = vmatpush1.bf16.msra.mxu0 %v241
    %261 = vmatprep.subr.bf16.mxu0 0
    %262 = vmatpush1.bf16.msra.mxu0 %v242
    %263 = vmatprep.subr.bf16.mxu0 0
    %264 = vmatpush1.bf16.msra.mxu0 %v243
    %265 = vmatprep.subr.bf16.mxu0 0
    %266 = vmatpush1.bf16.msra.mxu0 %v244
    %267 = vmatprep.subr.bf16.mxu0 0
    %268 = vmatpush1.bf16.msra.mxu0 %v245
    %269 = vmatprep.subr.bf16.mxu0 0
    %270 = vmatpush1.bf16.msra.mxu0 %v246
    %271 = vmatprep.subr.bf16.mxu0 0
    %272 = vmatpush1.bf16.msra.mxu0 0
    %273 = vmatprep.subr.bf16.mxu0 0
    %274 = vmatpush1.bf16.msra.mxu0 0
    %275 = vmatprep.subr.bf16.mxu0 0
    %276 = vmatpush1.bf16.msra.mxu0 0
    %277 = vmatprep.subr.bf16.mxu0 0
    %278 = vmatpush1.bf16.msra.mxu0 0
    %279 = vmatprep.subr.bf16.mxu0 0
    %280 = vmatpush1.bf16.msra.mxu0 0
    %281 = vmatprep.subr.bf16.mxu0 0
    %282 = vmatpush1.bf16.msra.mxu0 0
    %283 = vmatprep.subr.bf16.mxu0 0
    %284 = vmatpush1.bf16.msra.mxu0 0
    %285 = vmatprep.subr.bf16.mxu0 0
    %286 = vmatpush1.bf16.msra.mxu0 0
    %287 = vmatprep.mubr.bf16.mxu0 0
    %288 = vmatmul.mubr.bf16.gmra.mrb[0].mxu0 %v183
    %v289 = vpop.f32.mrb[0].mxu0
    %v290 = vadd.f32 %v205, %v289
    %v291 = vpop.f32.mrb[0].mxu0
    %v292 = vpop.f32.mrb[0].mxu0
    %v293 = vadd.f32 %v205, %v292
    %v294 = vpop.f32.mrb[0].mxu0
    %295 = vdwg.mxu0
    %v296 = vmax.f32 %v290, 0.0
    %v297 = vmax.f32 %v293, 0.0
    %v298 = vpack.c.bf16 %v297, %v296
    %v299 = vld [vmem:[#allocation8] sm:$0xf]
    %v300 = vld [vmem:[#allocation8 + $0x4] sm:$0xf]
    %v301 = vld [vmem:[#allocation8 + $0x8] sm:$0xf]
    %v302 = vld [vmem:[#allocation8 + $0xc] sm:$0xf]
    %v303 = vld [vmem:[#allocation8 + $0x10] sm:$0xf]
    %v304 = vld [vmem:[#allocation8 + $0x14] sm:$0xf]
    %v305 = vld [vmem:[#allocation8 + $0x18] sm:$0xf]
    %v306 = vld [vmem:[#allocation8 + $0x1c] sm:$0xf]
    %v307 = vld [vmem:[#allocation8 + $0x20] sm:$0xf]
    %v308 = vld [vmem:[#allocation8 + $0x24] sm:$0xf]
    %v309 = vld [vmem:[#allocation8 + $0x28] sm:$0xf]
    %v310 = vld [vmem:[#allocation8 + $0x2c] sm:$0xf]
    %v311 = vld [vmem:[#allocation8 + $0x30] sm:$0xf]
    %v312 = vld [vmem:[#allocation8 + $0x34] sm:$0xf]
    %v313 = vld [vmem:[#allocation8 + $0x38] sm:$0xf]
    %v314 = vld [vmem:[#allocation8 + $0x3c] sm:$0xf]
    %v315 = vld [vmem:[%s5] sm:$0x1]
    %v317 = vlaneseq
    %v318 = vshrl.u32 %v317, 7
    %v319 = vsub.s32 0, %v318
    %v320 = vrot.slane %v315, %v319
    %v338 = vunpack.c.l.b16 %v299
    %v339 = vunpack.c.l.b16 %v300
    %v340 = vunpack.c.l.b16 %v301
    %v341 = vunpack.c.l.b16 %v302
    %v342 = vunpack.c.l.b16 %v303
    %v343 = vunpack.c.l.b16 %v304
    %v344 = vunpack.c.l.b16 %v305
    %v345 = vunpack.c.l.b16 %v306
    %v346 = vunpack.c.l.b16 %v307
    %v347 = vunpack.c.l.b16 %v308
    %v348 = vunpack.c.l.b16 %v309
    %v349 = vunpack.c.l.b16 %v310
    %v350 = vunpack.c.l.b16 %v311
    %v351 = vunpack.c.l.b16 %v312
    %v352 = vunpack.c.l.b16 %v313
    %v353 = vunpack.c.l.b16 %v314
    %v354 = vpack.c.b16 %v339, %v338
    %v355 = vpack.c.b16 %v341, %v340
    %v356 = vpack.c.b16 %v343, %v342
    %v357 = vpack.c.b16 %v345, %v344
    %v358 = vpack.c.b16 %v347, %v346
    %v359 = vpack.c.b16 %v349, %v348
    %v360 = vpack.c.b16 %v351, %v350
    %v361 = vpack.c.b16 %v353, %v352
    %370 = vmatprep.subr.bf16.mxu0 0
    %371 = vmatpush1.bf16.msra.mxu0 %v354
    %372 = vmatprep.subr.bf16.mxu0 0
    %373 = vmatpush1.bf16.msra.mxu0 %v355
    %374 = vmatprep.subr.bf16.mxu0 0
    %375 = vmatpush1.bf16.msra.mxu0 %v356
    %376 = vmatprep.subr.bf16.mxu0 0
    %377 = vmatpush1.bf16.msra.mxu0 %v357
    %378 = vmatprep.subr.bf16.mxu0 0
    %379 = vmatpush1.bf16.msra.mxu0 %v358
    %380 = vmatprep.subr.bf16.mxu0 0
    %381 = vmatpush1.bf16.msra.mxu0 %v359
    %382 = vmatprep.subr.bf16.mxu0 0
    %383 = vmatpush1.bf16.msra.mxu0 %v360
    %384 = vmatprep.subr.bf16.mxu0 0
    %385 = vmatpush1.bf16.msra.mxu0 %v361
    %386 = vmatprep.subr.bf16.mxu0 0
    %387 = vmatpush1.bf16.msra.mxu0 0
    %388 = vmatprep.subr.bf16.mxu0 0
    %389 = vmatpush1.bf16.msra.mxu0 0
    %390 = vmatprep.subr.bf16.mxu0 0
    %391 = vmatpush1.bf16.msra.mxu0 0
    %392 = vmatprep.subr.bf16.mxu0 0
    %393 = vmatpush1.bf16.msra.mxu0 0
    %394 = vmatprep.subr.bf16.mxu0 0
    %395 = vmatpush1.bf16.msra.mxu0 0
    %396 = vmatprep.subr.bf16.mxu0 0
    %397 = vmatpush1.bf16.msra.mxu0 0
    %398 = vmatprep.subr.bf16.mxu0 0
    %399 = vmatpush1.bf16.msra.mxu0 0
    %400 = vmatprep.subr.bf16.mxu0 0
    %401 = vmatpush1.bf16.msra.mxu0 0
    %402 = vmatprep.mubr.bf16.mxu0 0
    %403 = vmatmul.mubr.bf16.gmra.mrb[0].mxu0 %v298
    %v404 = vpop.f32.mrb[0].mxu0
    %v405 = vadd.f32 %v320, %v404
    %v406 = vpop.f32.mrb[0].mxu0
    %v407 = vpop.f32.mrb[0].mxu0
    %v408 = vadd.f32 %v320, %v407
    %v409 = vpop.f32.mrb[0].mxu0
    %410 = vdwg.mxu0
    %v411 = vmax.f32 %v405, 0.0
    %v412 = vmax.f32 %v408, 0.0
    %v413 = vadd.f32 %v411, %v412
    %v414 = vrot.slane %v413, 4
    %v415 = vadd.f32 %v413, %v414
    %v416 = vrot.slane %v415, 2
    %v417 = vadd.f32 %v415, %v416
    %v418 = vrot.slane %v417, 1
    %v419 = vadd.f32 %v417, %v418
    %v420 = vrcp.pop 16.0
    %v421 = vmul.f32 %v419, %v420
    %v422 = vmul.f32 %v411, %v411
    %v423 = vmul.f32 %v412, %v412
    %v424 = vadd.f32 %v422, %v423
    %v425 = vrot.slane %v424, 4
    %v426 = vadd.f32 %v424, %v425
    %v427 = vrot.slane %v426, 2
    %v428 = vadd.f32 %v426, %v427
    %v429 = vrot.slane %v428, 1
    %v430 = vadd.f32 %v428, %v429
    %v431 = vmul.f32 %v430, %v420
    %v432 = vmul.f32 %v421, %v421
    %v433 = vsub.f32 %v431, %v432
    %v434 = vsub.f32 %v411, %v421
    %v435 = vsub.f32 %v412, %v421
    %v436 = vadd.f32 %v433, 1e-05
    %v437 = vrsqrt.pop %v436
    %v438 = vmul.f32 %v434, %v437
    %v439 = vmul.f32 %v435, %v437
    %v440 = vld [vmem:[%s6] sm:$0x1]
    %v442 = vlaneseq
    %v443 = vshrl.u32 %v442, 7
    %v444 = vsub.s32 0, %v443
    %v445 = vrot.slane %v440, %v444
    %v447 = vmul.f32 %v438, %v445
    %v448 = vmul.f32 %v439, %v445
    %v449 = vld [vmem:[%s7] sm:$0x1]
    %v451 = vlaneseq
    %v452 = vshrl.u32 %v451, 7
    %v453 = vsub.s32 0, %v452
    %v454 = vrot.slane %v449, %v453
    %v456 = vadd.f32 %v447, %v454
    %v457 = vadd.f32 %v448, %v454
    %v458 = vpack.c.bf16 %v457, %v456
    %459 = vmatprep.subr.bf16.mxu0 0
    %460 = vmatpush1.bf16.msra.mxu0 %v458
    %461 = vmatprep.subr.bf16.mxu0 0
    %462 = vmatpush1.bf16.msra.mxu0 0
    %463 = vmatprep.subr.bf16.mxu0 0
    %464 = vmatpush1.bf16.msra.mxu0 0
    %465 = vmatprep.subr.bf16.mxu0 0
    %466 = vmatpush1.bf16.msra.mxu0 0
    %467 = vmatprep.subr.bf16.mxu0 0
    %468 = vmatpush1.bf16.msra.mxu0 0
    %469 = vmatprep.subr.bf16.mxu0 0
    %470 = vmatpush1.bf16.msra.mxu0 0
    %471 = vmatprep.subr.bf16.mxu0 0
    %472 = vmatpush1.bf16.msra.mxu0 0
    %473 = vmatprep.subr.bf16.mxu0 0
    %474 = vmatpush1.bf16.msra.mxu0 0
    %475 = vmatprep.subr.bf16.mxu0 0
    %476 = vmatpush1.bf16.msra.mxu0 0
    %477 = vmatprep.subr.bf16.mxu0 0
    %478 = vmatpush1.bf16.msra.mxu0 0
    %479 = vmatprep.subr.bf16.mxu0 0
    %480 = vmatpush1.bf16.msra.mxu0 0
    %481 = vmatprep.subr.bf16.mxu0 0
    %482 = vmatpush1.bf16.msra.mxu0 0
    %483 = vmatprep.subr.bf16.mxu0 0
    %484 = vmatpush1.bf16.msra.mxu0 0
    %485 = vmatprep.subr.bf16.mxu0 0
    %486 = vmatpush1.bf16.msra.mxu0 0
    %487 = vmatprep.subr.bf16.mxu0 0
    %488 = vmatpush1.bf16.msra.mxu0 0
    %489 = vmatprep.subr.bf16.mxu0 0
    %490 = vmatpush1.bf16.msra.mxu0 0
    %491 = vmatprep.mubr.bf16.mxu0 0
    %492 = vmatmul.mubr.bf16.gmra.mrb[0].mxu0 %v140
    %v493 = vpop.f32.mrb[0].mxu0
    %v494 = vadd.f32 0.0, %v493
    %v495 = vpop.f32.mrb[0].mxu0
    %v496 = vpop.f32.mrb[0].mxu0
    %v497 = vadd.f32 0.0, %v496
    %v498 = vpop.f32.mrb[0].mxu0
    %499 = vdwg.mxu0
    %v500 = vpack.c.bf16 %v497, %v494
    %s501 = scalar_lea.vmem [#allocation7], 64
    %v502 = vld [vmem:[%s501] sm:$0xf]
    %v503 = vld [vmem:[%s501 + $0x4] sm:$0xf]
    %v504 = vld [vmem:[%s501 + $0x8] sm:$0xf]
    %v505 = vld [vmem:[%s501 + $0xc] sm:$0xf]
    %v506 = vld [vmem:[%s501 + $0x10] sm:$0xf]
    %v507 = vld [vmem:[%s501 + $0x14] sm:$0xf]
    %v508 = vld [vmem:[%s501 + $0x18] sm:$0xf]
    %v509 = vld [vmem:[%s501 + $0x1c] sm:$0xf]
    %v510 = vld [vmem:[%s501 + $0x20] sm:$0xf]
    %v511 = vld [vmem:[%s501 + $0x24] sm:$0xf]
    %v512 = vld [vmem:[%s501 + $0x28] sm:$0xf]
    %v513 = vld [vmem:[%s501 + $0x2c] sm:$0xf]
    %v514 = vld [vmem:[%s501 + $0x30] sm:$0xf]
    %v515 = vld [vmem:[%s501 + $0x34] sm:$0xf]
    %v516 = vld [vmem:[%s501 + $0x38] sm:$0xf]
    %v517 = vld [vmem:[%s501 + $0x3c] sm:$0xf]
    %s518 = scalar_lea.vmem %s3, 1
    %v519 = vld [vmem:[%s518] sm:$0x1]
    %v521 = vlaneseq
    %v522 = vshrl.u32 %v521, 7
    %v523 = vsub.s32 0, %v522
    %v524 = vrot.slane %v519, %v523
    %v542 = vunpack.c.l.b16 %v502
    %v543 = vunpack.c.l.b16 %v503
    %v544 = vunpack.c.l.b16 %v504
    %v545 = vunpack.c.l.b16 %v505
    %v546 = vunpack.c.l.b16 %v506
    %v547 = vunpack.c.l.b16 %v507
    %v548 = vunpack.c.l.b16 %v508
    %v549 = vunpack.c.l.b16 %v509
    %v550 = vunpack.c.l.b16 %v510
    %v551 = vunpack.c.l.b16 %v511
    %v552 = vunpack.c.l.b16 %v512
    %v553 = vunpack.c.l.b16 %v513
    %v554 = vunpack.c.l.b16 %v514
    %v555 = vunpack.c.l.b16 %v515
    %v556 = vunpack.c.l.b16 %v516
    %v557 = vunpack.c.l.b16 %v517
    %v558 = vpack.c.b16 %v543, %v542
    %v559 = vpack.c.b16 %v545, %v544
    %v560 = vpack.c.b16 %v547, %v546
    %v561 = vpack.c.b16 %v549, %v548
    %v562 = vpack.c.b16 %v551, %v550
    %v563 = vpack.c.b16 %v553, %v552
    %v564 = vpack.c.b16 %v555, %v554
    %v565 = vpack.c.b16 %v557, %v556
    %574 = vmatprep.subr.bf16.mxu0 0
    %575 = vmatpush1.bf16.msra.mxu0 %v558
    %576 = vmatprep.subr.bf16.mxu0 0
    %577 = vmatpush1.bf16.msra.mxu0 %v559
    %578 = vmatprep.subr.bf16.mxu0 0
    %579 = vmatpush1.bf16.msra.mxu0 %v560
    %580 = vmatprep.subr.bf16.mxu0 0
    %581 = vmatpush1.bf16.msra.mxu0 %v561
    %582 = vmatprep.subr.bf16.mxu0 0
    %583 = vmatpush1.bf16.msra.mxu0 %v562
    %584 = vmatprep.subr.bf16.mxu0 0
    %585 = vmatpush1.bf16.msra.mxu0 %v563
    %586 = vmatprep.subr.bf16.mxu0 0
    %587 = vmatpush1.bf16.msra.mxu0 %v564
    %588 = vmatprep.subr.bf16.mxu0 0
    %589 = vmatpush1.bf16.msra.mxu0 %v565
    %590 = vmatprep.subr.bf16.mxu0 0
    %591 = vmatpush1.bf16.msra.mxu0 0
    %592 = vmatprep.subr.bf16.mxu0 0
    %593 = vmatpush1.bf16.msra.mxu0 0
    %594 = vmatprep.subr.bf16.mxu0 0
    %595 = vmatpush1.bf16.msra.mxu0 0
    %596 = vmatprep.subr.bf16.mxu0 0
    %597 = vmatpush1.bf16.msra.mxu0 0
    %598 = vmatprep.subr.bf16.mxu0 0
    %599 = vmatpush1.bf16.msra.mxu0 0
    %600 = vmatprep.subr.bf16.mxu0 0
    %601 = vmatpush1.bf16.msra.mxu0 0
    %602 = vmatprep.subr.bf16.mxu0 0
    %603 = vmatpush1.bf16.msra.mxu0 0
    %604 = vmatprep.subr.bf16.mxu0 0
    %605 = vmatpush1.bf16.msra.mxu0 0
    %606 = vmatprep.mubr.bf16.mxu0 0
    %607 = vmatmul.mubr.bf16.gmra.mrb[0].mxu0 %v500
    %v608 = vpop.f32.mrb[0].mxu0
    %v609 = vadd.f32 %v524, %v608
    %v610 = vpop.f32.mrb[0].mxu0
    %v611 = vpop.f32.mrb[0].mxu0
    %v612 = vadd.f32 %v524, %v611
    %v613 = vpop.f32.mrb[0].mxu0
    %614 = vdwg.mxu0
    %v615 = vmax.f32 %v609, 0.0
    %v616 = vmax.f32 %v612, 0.0
    %v617 = vpack.c.bf16 %v616, %v615
    %s618 = scalar_lea.vmem [#allocation8], 64
    %v619 = vld [vmem:[%s618] sm:$0xf]
    %v620 = vld [vmem:[%s618 + $0x4] sm:$0xf]
    %v621 = vld [vmem:[%s618 + $0x8] sm:$0xf]
    %v622 = vld [vmem:[%s618 + $0xc] sm:$0xf]
    %v623 = vld [vmem:[%s618 + $0x10] sm:$0xf]
    %v624 = vld [vmem:[%s618 + $0x14] sm:$0xf]
    %v625 = vld [vmem:[%s618 + $0x18] sm:$0xf]
    %v626 = vld [vmem:[%s618 + $0x1c] sm:$0xf]
    %v627 = vld [vmem:[%s618 + $0x20] sm:$0xf]
    %v628 = vld [vmem:[%s618 + $0x24] sm:$0xf]
    %v629 = vld [vmem:[%s618 + $0x28] sm:$0xf]
    %v630 = vld [vmem:[%s618 + $0x2c] sm:$0xf]
    %v631 = vld [vmem:[%s618 + $0x30] sm:$0xf]
    %v632 = vld [vmem:[%s618 + $0x34] sm:$0xf]
    %v633 = vld [vmem:[%s618 + $0x38] sm:$0xf]
    %v634 = vld [vmem:[%s618 + $0x3c] sm:$0xf]
    %s635 = scalar_lea.vmem %s5, 1
    %v636 = vld [vmem:[%s635] sm:$0x1]
    %v638 = vlaneseq
    %v639 = vshrl.u32 %v638, 7
    %v640 = vsub.s32 0, %v639
    %v641 = vrot.slane %v636, %v640
    %v659 = vunpack.c.l.b16 %v619
    %v660 = vunpack.c.l.b16 %v620
    %v661 = vunpack.c.l.b16 %v621
    %v662 = vunpack.c.l.b16 %v622
    %v663 = vunpack.c.l.b16 %v623
    %v664 = vunpack.c.l.b16 %v624
    %v665 = vunpack.c.l.b16 %v625
    %v666 = vunpack.c.l.b16 %v626
    %v667 = vunpack.c.l.b16 %v627
    %v668 = vunpack.c.l.b16 %v628
    %v669 = vunpack.c.l.b16 %v629
    %v670 = vunpack.c.l.b16 %v630
    %v671 = vunpack.c.l.b16 %v631
    %v672 = vunpack.c.l.b16 %v632
    %v673 = vunpack.c.l.b16 %v633
    %v674 = vunpack.c.l.b16 %v634
    %v675 = vpack.c.b16 %v660, %v659
    %v676 = vpack.c.b16 %v662, %v661
    %v677 = vpack.c.b16 %v664, %v663
    %v678 = vpack.c.b16 %v666, %v665
    %v679 = vpack.c.b16 %v668, %v667
    %v680 = vpack.c.b16 %v670, %v669
    %v681 = vpack.c.b16 %v672, %v671
    %v682 = vpack.c.b16 %v674, %v673
    %691 = vmatprep.subr.bf16.mxu0 0
    %692 = vmatpush1.bf16.msra.mxu0 %v675
    %693 = vmatprep.subr.bf16.mxu0 0
    %694 = vmatpush1.bf16.msra.mxu0 %v676
    %695 = vmatprep.subr.bf16.mxu0 0
    %696 = vmatpush1.bf16.msra.mxu0 %v677
    %697 = vmatprep.subr.bf16.mxu0 0
    %698 = vmatpush1.bf16.msra.mxu0 %v678
    %699 = vmatprep.subr.bf16.mxu0 0
    %700 = vmatpush1.bf16.msra.mxu0 %v679
    %701 = vmatprep.subr.bf16.mxu0 0
    %702 = vmatpush1.bf16.msra.mxu0 %v680
    %703 = vmatprep.subr.bf16.mxu0 0
    %704 = vmatpush1.bf16.msra.mxu0 %v681
    %705 = vmatprep.subr.bf16.mxu0 0
    %706 = vmatpush1.bf16.msra.mxu0 %v682
    %707 = vmatprep.subr.bf16.mxu0 0
    %708 = vmatpush1.bf16.msra.mxu0 0
    %709 = vmatprep.subr.bf16.mxu0 0
    %710 = vmatpush1.bf16.msra.mxu0 0
    %711 = vmatprep.subr.bf16.mxu0 0
    %712 = vmatpush1.bf16.msra.mxu0 0
    %713 = vmatprep.subr.bf16.mxu0 0
    %714 = vmatpush1.bf16.msra.mxu0 0
    %715 = vmatprep.subr.bf16.mxu0 0
    %716 = vmatpush1.bf16.msra.mxu0 0
    %717 = vmatprep.subr.bf16.mxu0 0
    %718 = vmatpush1.bf16.msra.mxu0 0
    %719 = vmatprep.subr.bf16.mxu0 0
    %720 = vmatpush1.bf16.msra.mxu0 0
    %721 = vmatprep.subr.bf16.mxu0 0
    %722 = vmatpush1.bf16.msra.mxu0 0
    %723 = vmatprep.mubr.bf16.mxu0 0
    %724 = vmatmul.mubr.bf16.gmra.mrb[0].mxu0 %v617
    %v725 = vpop.f32.mrb[0].mxu0
    %v726 = vadd.f32 %v641, %v725
    %v727 = vpop.f32.mrb[0].mxu0
    %v728 = vpop.f32.mrb[0].mxu0
    %v729 = vadd.f32 %v641, %v728
    %v730 = vpop.f32.mrb[0].mxu0
    %731 = vdwg.mxu0
    %v732 = vmax.f32 %v726, 0.0
    %v733 = vmax.f32 %v729, 0.0
    %v734 = vadd.f32 %v732, %v733
    %v735 = vrot.slane %v734, 4
    %v736 = vadd.f32 %v734, %v735
    %v737 = vrot.slane %v736, 2
    %v738 = vadd.f32 %v736, %v737
    %v739 = vrot.slane %v738, 1
    %v740 = vadd.f32 %v738, %v739
    %v741 = vmul.f32 %v740, %v420
    %v742 = vmul.f32 %v732, %v732
    %v743 = vmul.f32 %v733, %v733
    %v744 = vadd.f32 %v742, %v743
    %v745 = vrot.slane %v744, 4
    %v746 = vadd.f32 %v744, %v745
    %v747 = vrot.slane %v746, 2
    %v748 = vadd.f32 %v746, %v747
    %v749 = vrot.slane %v748, 1
    %v750 = vadd.f32 %v748, %v749
    %v751 = vmul.f32 %v750, %v420
    %v752 = vmul.f32 %v741, %v741
    %v753 = vsub.f32 %v751, %v752
    %v754 = vsub.f32 %v732, %v741
    %v755 = vsub.f32 %v733, %v741
    %v756 = vadd.f32 %v753, 1e-05
    %v757 = vrsqrt.pop %v756
    %v758 = vmul.f32 %v754, %v757
    %v759 = vmul.f32 %v755, %v757
    %s760 = scalar_lea.vmem %s6, 1
    %v761 = vld [vmem:[%s760] sm:$0x1]
    %v763 = vlaneseq
    %v764 = vshrl.u32 %v763, 7
    %v765 = vsub.s32 0, %v764
    %v766 = vrot.slane %v761, %v765
    %v768 = vmul.f32 %v758, %v766
    %v769 = vmul.f32 %v759, %v766
    %s770 = scalar_lea.vmem %s7, 1
    %v771 = vld [vmem:[%s770] sm:$0x1]
    %v773 = vlaneseq
    %v774 = vshrl.u32 %v773, 7
    %v775 = vsub.s32 0, %v774
    %v776 = vrot.slane %v771, %v775
    %v778 = vadd.f32 %v768, %v776
    %v779 = vadd.f32 %v769, %v776
    %v780 = vpack.c.bf16 %v779, %v778
    %781 = vmatprep.subr.bf16.mxu0 0
    %782 = vmatpush1.bf16.msra.mxu0 %v780
    %783 = vmatprep.subr.bf16.mxu0 0
    %784 = vmatpush1.bf16.msra.mxu0 0
    %785 = vmatprep.subr.bf16.mxu0 0
    %786 = vmatpush1.bf16.msra.mxu0 0
    %787 = vmatprep.subr.bf16.mxu0 0
    %788 = vmatpush1.bf16.msra.mxu0 0
    %789 = vmatprep.subr.bf16.mxu0 0
    %790 = vmatpush1.bf16.msra.mxu0 0
    %791 = vmatprep.subr.bf16.mxu0 0
    %792 = vmatpush1.bf16.msra.mxu0 0
    %793 = vmatprep.subr.bf16.mxu0 0
    %794 = vmatpush1.bf16.msra.mxu0 0
    %795 = vmatprep.subr.bf16.mxu0 0
    %796 = vmatpush1.bf16.msra.mxu0 0
    %797 = vmatprep.subr.bf16.mxu0 0
    %798 = vmatpush1.bf16.msra.mxu0 0
    %799 = vmatprep.subr.bf16.mxu0 0
    %800 = vmatpush1.bf16.msra.mxu0 0
    %801 = vmatprep.subr.bf16.mxu0 0
    %802 = vmatpush1.bf16.msra.mxu0 0
    %803 = vmatprep.subr.bf16.mxu0 0
    %804 = vmatpush1.bf16.msra.mxu0 0
    %805 = vmatprep.subr.bf16.mxu0 0
    %806 = vmatpush1.bf16.msra.mxu0 0
    %807 = vmatprep.subr.bf16.mxu0 0
    %808 = vmatpush1.bf16.msra.mxu0 0
    %809 = vmatprep.subr.bf16.mxu0 0
    %810 = vmatpush1.bf16.msra.mxu0 0
    %811 = vmatprep.subr.bf16.mxu0 0
    %812 = vmatpush1.bf16.msra.mxu0 0
    %813 = vmatprep.mubr.bf16.mxu0 0
    %814 = vmatmul.mubr.bf16.gmra.mrb[0].mxu0 %v140
    %v815 = vpop.f32.mrb[0].mxu0
    %v816 = vadd.f32 0.0, %v815
    %v817 = vpop.f32.mrb[0].mxu0
    %v818 = vpop.f32.mrb[0].mxu0
    %v819 = vadd.f32 0.0, %v818
    %v820 = vpop.f32.mrb[0].mxu0
    %821 = vdwg.mxu0
    %v822 = vpack.c.bf16 %v819, %v816
    %s823 = scalar_lea.vmem [#allocation7], 128
    %v824 = vld [vmem:[%s823] sm:$0xf]
    %v825 = vld [vmem:[%s823 + $0x4] sm:$0xf]
    %v826 = vld [vmem:[%s823 + $0x8] sm:$0xf]
    %v827 = vld [vmem:[%s823 + $0xc] sm:$0xf]
    %v828 = vld [vmem:[%s823 + $0x10] sm:$0xf]
    %v829 = vld [vmem:[%s823 + $0x14] sm:$0xf]
    %v830 = vld [vmem:[%s823 + $0x18] sm:$0xf]
    %v831 = vld [vmem:[%s823 + $0x1c] sm:$0xf]
    %v832 = vld [vmem:[%s823 + $0x20] sm:$0xf]
    %v833 = vld [vmem:[%s823 + $0x24] sm:$0xf]
    %v834 = vld [vmem:[%s823 + $0x28] sm:$0xf]
    %v835 = vld [vmem:[%s823 + $0x2c] sm:$0xf]
    %v836 = vld [vmem:[%s823 + $0x30] sm:$0xf]
    %v837 = vld [vmem:[%s823 + $0x34] sm:$0xf]
    %v838 = vld [vmem:[%s823 + $0x38] sm:$0xf]
    %v839 = vld [vmem:[%s823 + $0x3c] sm:$0xf]
    %s840 = scalar_lea.vmem %s3, 2
    %v841 = vld [vmem:[%s840] sm:$0x1]
    %v843 = vlaneseq
    %v844 = vshrl.u32 %v843, 7
    %v845 = vsub.s32 0, %v844
    %v846 = vrot.slane %v841, %v845
    %v864 = vunpack.c.l.b16 %v824
    %v865 = vunpack.c.l.b16 %v825
    %v866 = vunpack.c.l.b16 %v826
    %v867 = vunpack.c.l.b16 %v827
    %v868 = vunpack.c.l.b16 %v828
    %v869 = vunpack.c.l.b16 %v829
    %v870 = vunpack.c.l.b16 %v830
    %v871 = vunpack.c.l.b16 %v831
    %v872 = vunpack.c.l.b16 %v832
    %v873 = vunpack.c.l.b16 %v833
    %v874 = vunpack.c.l.b16 %v834
    %v875 = vunpack.c.l.b16 %v835
    %v876 = vunpack.c.l.b16 %v836
    %v877 = vunpack.c.l.b16 %v837
    %v878 = vunpack.c.l.b16 %v838
    %v879 = vunpack.c.l.b16 %v839
    %v880 = vpack.c.b16 %v865, %v864
    %v881 = vpack.c.b16 %v867, %v866
    %v882 = vpack.c.b16 %v869, %v868
    %v883 = vpack.c.b16 %v871, %v870
    %v884 = vpack.c.b16 %v873, %v872
    %v885 = vpack.c.b16 %v875, %v874
    %v886 = vpack.c.b16 %v877, %v876
    %v887 = vpack.c.b16 %v879, %v878
    %896 = vmatprep.subr.bf16.mxu0 0
    %897 = vmatpush1.bf16.msra.mxu0 %v880
    %898 = vmatprep.subr.bf16.mxu0 0
    %899 = vmatpush1.bf16.msra.mxu0 %v881
    %900 = vmatprep.subr.bf16.mxu0 0
    %901 = vmatpush1.bf16.msra.mxu0 %v882
    %902 = vmatprep.subr.bf16.mxu0 0
    %903 = vmatpush1.bf16.msra.mxu0 %v883
    %904 = vmatprep.subr.bf16.mxu0 0
    %905 = vmatpush1.bf16.msra.mxu0 %v884
    %906 = vmatprep.subr.bf16.mxu0 0
    %907 = vmatpush1.bf16.msra.mxu0 %v885
    %908 = vmatprep.subr.bf16.mxu0 0
    %909 = vmatpush1.bf16.msra.mxu0 %v886
    %910 = vmatprep.subr.bf16.mxu0 0
    %911 = vmatpush1.bf16.msra.mxu0 %v887
    %912 = vmatprep.subr.bf16.mxu0 0
    %913 = vmatpush1.bf16.msra.mxu0 0
    %914 = vmatprep.subr.bf16.mxu0 0
    %915 = vmatpush1.bf16.msra.mxu0 0
    %916 = vmatprep.subr.bf16.mxu0 0
    %917 = vmatpush1.bf16.msra.mxu0 0
    %918 = vmatprep.subr.bf16.mxu0 0
    %919 = vmatpush1.bf16.msra.mxu0 0
    %920 = vmatprep.subr.bf16.mxu0 0
    %921 = vmatpush1.bf16.msra.mxu0 0
    %922 = vmatprep.subr.bf16.mxu0 0
    %923 = vmatpush1.bf16.msra.mxu0 0
    %924 = vmatprep.subr.bf16.mxu0 0
    %925 = vmatpush1.bf16.msra.mxu0 0
    %926 = vmatprep.subr.bf16.mxu0 0
    %927 = vmatpush1.bf16.msra.mxu0 0
    %928 = vmatprep.mubr.bf16.mxu0 0
    %929 = vmatmul.mubr.bf16.gmra.mrb[0].mxu0 %v822
    %v930 = vpop.f32.mrb[0].mxu0
    %v931 = vadd.f32 %v846, %v930
    %v932 = vpop.f32.mrb[0].mxu0
    %v933 = vpop.f32.mrb[0].mxu0
    %v934 = vadd.f32 %v846, %v933
    %v935 = vpop.f32.mrb[0].mxu0
    %936 = vdwg.mxu0
    %v937 = vmax.f32 %v931, 0.0
    %v938 = vmax.f32 %v934, 0.0
    %v939 = vpack.c.bf16 %v938, %v937
    %s940 = scalar_lea.vmem [#allocation8], 128
    %v941 = vld [vmem:[%s940] sm:$0xf]
    %v942 = vld [vmem:[%s940 + $0x4] sm:$0xf]
    %v943 = vld [vmem:[%s940 + $0x8] sm:$0xf]
    %v944 = vld [vmem:[%s940 + $0xc] sm:$0xf]
    %v945 = vld [vmem:[%s940 + $0x10] sm:$0xf]
    %v946 = vld [vmem:[%s940 + $0x14] sm:$0xf]
    %v947 = vld [vmem:[%s940 + $0x18] sm:$0xf]
    %v948 = vld [vmem:[%s940 + $0x1c] sm:$0xf]
    %v949 = vld [vmem:[%s940 + $0x20] sm:$0xf]
    %v950 = vld [vmem:[%s940 + $0x24] sm:$0xf]
    %v951 = vld [vmem:[%s940 + $0x28] sm:$0xf]
    %v952 = vld [vmem:[%s940 + $0x2c] sm:$0xf]
    %v953 = vld [vmem:[%s940 + $0x30] sm:$0xf]
    %v954 = vld [vmem:[%s940 + $0x34] sm:$0xf]
    %v955 = vld [vmem:[%s940 + $0x38] sm:$0xf]
    %v956 = vld [vmem:[%s940 + $0x3c] sm:$0xf]
    %s957 = scalar_lea.vmem %s5, 2
    %v958 = vld [vmem:[%s957] sm:$0x1]
    %v960 = vlaneseq
    %v961 = vshrl.u32 %v960, 7
    %v962 = vsub.s32 0, %v961
    %v963 = vrot.slane %v958, %v962
    %v981 = vunpack.c.l.b16 %v941
    %v982 = vunpack.c.l.b16 %v942
    %v983 = vunpack.c.l.b16 %v943
    %v984 = vunpack.c.l.b16 %v944
    %v985 = vunpack.c.l.b16 %v945
    %v986 = vunpack.c.l.b16 %v946
    %v987 = vunpack.c.l.b16 %v947
    %v988 = vunpack.c.l.b16 %v948
    %v989 = vunpack.c.l.b16 %v949
    %v990 = vunpack.c.l.b16 %v950
    %v991 = vunpack.c.l.b16 %v951
    %v992 = vunpack.c.l.b16 %v952
    %v993 = vunpack.c.l.b16 %v953
    %v994 = vunpack.c.l.b16 %v954
    %v995 = vunpack.c.l.b16 %v955
    %v996 = vunpack.c.l.b16 %v956
    %v997 = vpack.c.b16 %v982, %v981
    %v998 = vpack.c.b16 %v984, %v983
    %v999 = vpack.c.b16 %v986, %v985
    %v1000 = vpack.c.b16 %v988, %v987
    %v1001 = vpack.c.b16 %v990, %v989
    %v1002 = vpack.c.b16 %v992, %v991
    %v1003 = vpack.c.b16 %v994, %v993
    %v1004 = vpack.c.b16 %v996, %v995
    %1013 = vmatprep.subr.bf16.mxu0 0
    %1014 = vmatpush1.bf16.msra.mxu0 %v997
    %1015 = vmatprep.subr.bf16.mxu0 0
    %1016 = vmatpush1.bf16.msra.mxu0 %v998
    %1017 = vmatprep.subr.bf16.mxu0 0
    %1018 = vmatpush1.bf16.msra.mxu0 %v999
    %1019 = vmatprep.subr.bf16.mxu0 0
    %1020 = vmatpush1.bf16.msra.mxu0 %v1000
    %1021 = vmatprep.subr.bf16.mxu0 0
    %1022 = vmatpush1.bf16.msra.mxu0 %v1001
    %1023 = vmatprep.subr.bf16.mxu0 0
    %1024 = vmatpush1.bf16.msra.mxu0 %v1002
    %1025 = vmatprep.subr.bf16.mxu0 0
    %1026 = vmatpush1.bf16.msra.mxu0 %v1003
    %1027 = vmatprep.subr.bf16.mxu0 0
    %1028 = vmatpush1.bf16.msra.mxu0 %v1004
    %1029 = vmatprep.subr.bf16.mxu0 0
    %1030 = vmatpush1.bf16.msra.mxu0 0
    %1031 = vmatprep.subr.bf16.mxu0 0
    %1032 = vmatpush1.bf16.msra.mxu0 0
    %1033 = vmatprep.subr.bf16.mxu0 0
    %1034 = vmatpush1.bf16.msra.mxu0 0
    %1035 = vmatprep.subr.bf16.mxu0 0
    %1036 = vmatpush1.bf16.msra.mxu0 0
    %1037 = vmatprep.subr.bf16.mxu0 0
    %1038 = vmatpush1.bf16.msra.mxu0 0
    %1039 = vmatprep.subr.bf16.mxu0 0
    %1040 = vmatpush1.bf16.msra.mxu0 0
    %1041 = vmatprep.subr.bf16.mxu0 0
    %1042 = vmatpush1.bf16.msra.mxu0 0
    %1043 = vmatprep.subr.bf16.mxu0 0
    %1044 = vmatpush1.bf16.msra.mxu0 0
    %1045 = vmatprep.mubr.bf16.mxu0 0
    %1046 = vmatmul.mubr.bf16.gmra.mrb[0].mxu0 %v939
    %v1047 = vpop.f32.mrb[0].mxu0
    %v1048 = vadd.f32 %v963, %v1047
    %v1049 = vpop.f32.mrb[0].mxu0
    %v1050 = vpop.f32.mrb[0].mxu0
    %v1051 = vadd.f32 %v963, %v1050
    %v1052 = vpop.f32.mrb[0].mxu0
    %1053 = vdwg.mxu0
    %v1054 = vmax.f32 %v1048, 0.0
    %v1055 = vmax.f32 %v1051, 0.0
    %v1056 = vadd.f32 %v1054, %v1055
    %v1057 = vrot.slane %v1056, 4
    %v1058 = vadd.f32 %v1056, %v1057
    %v1059 = vrot.slane %v1058, 2
    %v1060 = vadd.f32 %v1058, %v1059
    %v1061 = vrot.slane %v1060, 1
    %v1062 = vadd.f32 %v1060, %v1061
    %v1063 = vmul.f32 %v1062, %v420
    %v1064 = vmul.f32 %v1054, %v1054
    %v1065 = vmul.f32 %v1055, %v1055
    %v1066 = vadd.f32 %v1064, %v1065
    %v1067 = vrot.slane %v1066, 4
    %v1068 = vadd.f32 %v1066, %v1067
    %v1069 = vrot.slane %v1068, 2
    %v1070 = vadd.f32 %v1068, %v1069
    %v1071 = vrot.slane %v1070, 1
    %v1072 = vadd.f32 %v1070, %v1071
    %v1073 = vmul.f32 %v1072, %v420
    %v1074 = vmul.f32 %v1063, %v1063
    %v1075 = vsub.f32 %v1073, %v1074
    %v1076 = vsub.f32 %v1054, %v1063
    %v1077 = vsub.f32 %v1055, %v1063
    %v1078 = vadd.f32 %v1075, 1e-05
    %v1079 = vrsqrt.pop %v1078
    %v1080 = vmul.f32 %v1076, %v1079
    %v1081 = vmul.f32 %v1077, %v1079
    %s1082 = scalar_lea.vmem %s6, 2
    %v1083 = vld [vmem:[%s1082] sm:$0x1]
    %v1085 = vlaneseq
    %v1086 = vshrl.u32 %v1085, 7
    %v1087 = vsub.s32 0, %v1086
    %v1088 = vrot.slane %v1083, %v1087
    %v1090 = vmul.f32 %v1080, %v1088
    %v1091 = vmul.f32 %v1081, %v1088
    %s1092 = scalar_lea.vmem %s7, 2
    %v1093 = vld [vmem:[%s1092] sm:$0x1]
    %v1095 = vlaneseq
    %v1096 = vshrl.u32 %v1095, 7
    %v1097 = vsub.s32 0, %v1096
    %v1098 = vrot.slane %v1093, %v1097
    %v1100 = vadd.f32 %v1090, %v1098
    %v1101 = vadd.f32 %v1091, %v1098
    %v1102 = vpack.c.bf16 %v1101, %v1100
    %1103 = vmatprep.subr.bf16.mxu0 0
    %1104 = vmatpush1.bf16.msra.mxu0 %v1102
    %1105 = vmatprep.subr.bf16.mxu0 0
    %1106 = vmatpush1.bf16.msra.mxu0 0
    %1107 = vmatprep.subr.bf16.mxu0 0
    %1108 = vmatpush1.bf16.msra.mxu0 0
    %1109 = vmatprep.subr.bf16.mxu0 0
    %1110 = vmatpush1.bf16.msra.mxu0 0
    %1111 = vmatprep.subr.bf16.mxu0 0
    %1112 = vmatpush1.bf16.msra.mxu0 0
    %1113 = vmatprep.subr.bf16.mxu0 0
    %1114 = vmatpush1.bf16.msra.mxu0 0
    %1115 = vmatprep.subr.bf16.mxu0 0
    %1116 = vmatpush1.bf16.msra.mxu0 0
    %1117 = vmatprep.subr.bf16.mxu0 0
    %1118 = vmatpush1.bf16.msra.mxu0 0
    %1119 = vmatprep.subr.bf16.mxu0 0
    %1120 = vmatpush1.bf16.msra.mxu0 0
    %1121 = vmatprep.subr.bf16.mxu0 0
    %1122 = vmatpush1.bf16.msra.mxu0 0
    %1123 = vmatprep.subr.bf16.mxu0 0
    %1124 = vmatpush1.bf16.msra.mxu0 0
    %1125 = vmatprep.subr.bf16.mxu0 0
    %1126 = vmatpush1.bf16.msra.mxu0 0
    %1127 = vmatprep.subr.bf16.mxu0 0
    %1128 = vmatpush1.bf16.msra.mxu0 0
    %1129 = vmatprep.subr.bf16.mxu0 0
    %1130 = vmatpush1.bf16.msra.mxu0 0
    %1131 = vmatprep.subr.bf16.mxu0 0
    %1132 = vmatpush1.bf16.msra.mxu0 0
    %1133 = vmatprep.subr.bf16.mxu0 0
    %1134 = vmatpush1.bf16.msra.mxu0 0
    %1135 = vmatprep.mubr.bf16.mxu0 0
    %1136 = vmatmul.mubr.bf16.gmra.mrb[0].mxu0 %v140
    %v1137 = vpop.f32.mrb[0].mxu0
    %v1138 = vadd.f32 0.0, %v1137
    %v1139 = vpop.f32.mrb[0].mxu0
    %v1140 = vpop.f32.mrb[0].mxu0
    %v1141 = vadd.f32 0.0, %v1140
    %v1142 = vpop.f32.mrb[0].mxu0
    %1143 = vdwg.mxu0
    %v1144 = vpack.c.bf16 %v1141, %v1138
    %s1145 = scalar_lea.vmem [#allocation7], 192
    %v1146 = vld [vmem:[%s1145] sm:$0xf]
    %v1147 = vld [vmem:[%s1145 + $0x4] sm:$0xf]
    %v1148 = vld [vmem:[%s1145 + $0x8] sm:$0xf]
    %v1149 = vld [vmem:[%s1145 + $0xc] sm:$0xf]
    %v1150 = vld [vmem:[%s1145 + $0x10] sm:$0xf]
    %v1151 = vld [vmem:[%s1145 + $0x14] sm:$0xf]
    %v1152 = vld [vmem:[%s1145 + $0x18] sm:$0xf]
    %v1153 = vld [vmem:[%s1145 + $0x1c] sm:$0xf]
    %v1154 = vld [vmem:[%s1145 + $0x20] sm:$0xf]
    %v1155 = vld [vmem:[%s1145 + $0x24] sm:$0xf]
    %v1156 = vld [vmem:[%s1145 + $0x28] sm:$0xf]
    %v1157 = vld [vmem:[%s1145 + $0x2c] sm:$0xf]
    %v1158 = vld [vmem:[%s1145 + $0x30] sm:$0xf]
    %v1159 = vld [vmem:[%s1145 + $0x34] sm:$0xf]
    %v1160 = vld [vmem:[%s1145 + $0x38] sm:$0xf]
    %v1161 = vld [vmem:[%s1145 + $0x3c] sm:$0xf]
    %s1162 = scalar_lea.vmem %s3, 3
    %v1163 = vld [vmem:[%s1162] sm:$0x1]
    %v1165 = vlaneseq
    %v1166 = vshrl.u32 %v1165, 7
    %v1167 = vsub.s32 0, %v1166
    %v1168 = vrot.slane %v1163, %v1167
    %v1186 = vunpack.c.l.b16 %v1146
    %v1187 = vunpack.c.l.b16 %v1147
    %v1188 = vunpack.c.l.b16 %v1148
    %v1189 = vunpack.c.l.b16 %v1149
    %v1190 = vunpack.c.l.b16 %v1150
    %v1191 = vunpack.c.l.b16 %v1151
    %v1192 = vunpack.c.l.b16 %v1152
    %v1193 = vunpack.c.l.b16 %v1153
    %v1194 = vunpack.c.l.b16 %v1154
    %v1195 = vunpack.c.l.b16 %v1155
    %v1196 = vunpack.c.l.b16 %v1156
    %v1197 = vunpack.c.l.b16 %v1157
    %v1198 = vunpack.c.l.b16 %v1158
    %v1199 = vunpack.c.l.b16 %v1159
    %v1200 = vunpack.c.l.b16 %v1160
    %v1201 = vunpack.c.l.b16 %v1161
    %v1202 = vpack.c.b16 %v1187, %v1186
    %v1203 = vpack.c.b16 %v1189, %v1188
    %v1204 = vpack.c.b16 %v1191, %v1190
    %v1205 = vpack.c.b16 %v1193, %v1192
    %v1206 = vpack.c.b16 %v1195, %v1194
    %v1207 = vpack.c.b16 %v1197, %v1196
    %v1208 = vpack.c.b16 %v1199, %v1198
    %v1209 = vpack.c.b16 %v1201, %v1200
    %1218 = vmatprep.subr.bf16.mxu0 0
    %1219 = vmatpush1.bf16.msra.mxu0 %v1202
    %1220 = vmatprep.subr.bf16.mxu0 0
    %1221 = vmatpush1.bf16.msra.mxu0 %v1203
    %1222 = vmatprep.subr.bf16.mxu0 0
    %1223 = vmatpush1.bf16.msra.mxu0 %v1204
    %1224 = vmatprep.subr.bf16.mxu0 0
    %1225 = vmatpush1.bf16.msra.mxu0 %v1205
    %1226 = vmatprep.subr.bf16.mxu0 0
    %1227 = vmatpush1.bf16.msra.mxu0 %v1206
    %1228 = vmatprep.subr.bf16.mxu0 0
    %1229 = vmatpush1.bf16.msra.mxu0 %v1207
    %1230 = vmatprep.subr.bf16.mxu0 0
    %1231 = vmatpush1.bf16.msra.mxu0 %v1208
    %1232 = vmatprep.subr.bf16.mxu0 0
    %1233 = vmatpush1.bf16.msra.mxu0 %v1209
    %1234 = vmatprep.subr.bf16.mxu0 0
    %1235 = vmatpush1.bf16.msra.mxu0 0
    %1236 = vmatprep.subr.bf16.mxu0 0
    %1237 = vmatpush1.bf16.msra.mxu0 0
    %1238 = vmatprep.subr.bf16.mxu0 0
    %1239 = vmatpush1.bf16.msra.mxu0 0
    %1240 = vmatprep.subr.bf16.mxu0 0
    %1241 = vmatpush1.bf16.msra.mxu0 0
    %1242 = vmatprep.subr.bf16.mxu0 0
    %1243 = vmatpush1.bf16.msra.mxu0 0
    %1244 = vmatprep.subr.bf16.mxu0 0
    %1245 = vmatpush1.bf16.msra.mxu0 0
    %1246 = vmatprep.subr.bf16.mxu0 0
    %1247 = vmatpush1.bf16.msra.mxu0 0
    %1248 = vmatprep.subr.bf16.mxu0 0
    %1249 = vmatpush1.bf16.msra.mxu0 0
    %1250 = vmatprep.mubr.bf16.mxu0 0
    %1251 = vmatmul.mubr.bf16.gmra.mrb[0].mxu0 %v1144
    %v1252 = vpop.f32.mrb[0].mxu0
    %v1253 = vadd.f32 %v1168, %v1252
    %v1254 = vpop.f32.mrb[0].mxu0
    %v1255 = vpop.f32.mrb[0].mxu0
    %v1256 = vadd.f32 %v1168, %v1255
    %v1257 = vpop.f32.mrb[0].mxu0
    %1258 = vdwg.mxu0
    %v1259 = vmax.f32 %v1253, 0.0
    %v1260 = vmax.f32 %v1256, 0.0
    %v1261 = vpack.c.bf16 %v1260, %v1259
    %s1262 = scalar_lea.vmem [#allocation8], 192
    %v1263 = vld [vmem:[%s1262] sm:$0xf]
    %v1264 = vld [vmem:[%s1262 + $0x4] sm:$0xf]
    %v1265 = vld [vmem:[%s1262 + $0x8] sm:$0xf]
    %v1266 = vld [vmem:[%s1262 + $0xc] sm:$0xf]
    %v1267 = vld [vmem:[%s1262 + $0x10] sm:$0xf]
    %v1268 = vld [vmem:[%s1262 + $0x14] sm:$0xf]
    %v1269 = vld [vmem:[%s1262 + $0x18] sm:$0xf]
    %v1270 = vld [vmem:[%s1262 + $0x1c] sm:$0xf]
    %v1271 = vld [vmem:[%s1262 + $0x20] sm:$0xf]
    %v1272 = vld [vmem:[%s1262 + $0x24] sm:$0xf]
    %v1273 = vld [vmem:[%s1262 + $0x28] sm:$0xf]
    %v1274 = vld [vmem:[%s1262 + $0x2c] sm:$0xf]
    %v1275 = vld [vmem:[%s1262 + $0x30] sm:$0xf]
    %v1276 = vld [vmem:[%s1262 + $0x34] sm:$0xf]
    %v1277 = vld [vmem:[%s1262 + $0x38] sm:$0xf]
    %v1278 = vld [vmem:[%s1262 + $0x3c] sm:$0xf]
    %s1279 = scalar_lea.vmem %s5, 3
    %v1280 = vld [vmem:[%s1279] sm:$0x1]
    %v1282 = vlaneseq
    %v1283 = vshrl.u32 %v1282, 7
    %v1284 = vsub.s32 0, %v1283
    %v1285 = vrot.slane %v1280, %v1284
    %v1303 = vunpack.c.l.b16 %v1263
    %v1304 = vunpack.c.l.b16 %v1264
    %v1305 = vunpack.c.l.b16 %v1265
    %v1306 = vunpack.c.l.b16 %v1266
    %v1307 = vunpack.c.l.b16 %v1267
    %v1308 = vunpack.c.l.b16 %v1268
    %v1309 = vunpack.c.l.b16 %v1269
    %v1310 = vunpack.c.l.b16 %v1270
    %v1311 = vunpack.c.l.b16 %v1271
    %v1312 = vunpack.c.l.b16 %v1272
    %v1313 = vunpack.c.l.b16 %v1273
    %v1314 = vunpack.c.l.b16 %v1274
    %v1315 = vunpack.c.l.b16 %v1275
    %v1316 = vunpack.c.l.b16 %v1276
    %v1317 = vunpack.c.l.b16 %v1277
    %v1318 = vunpack.c.l.b16 %v1278
    %v1319 = vpack.c.b16 %v1304, %v1303
    %v1320 = vpack.c.b16 %v1306, %v1305
    %v1321 = vpack.c.b16 %v1308, %v1307
    %v1322 = vpack.c.b16 %v1310, %v1309
    %v1323 = vpack.c.b16 %v1312, %v1311
    %v1324 = vpack.c.b16 %v1314, %v1313
    %v1325 = vpack.c.b16 %v1316, %v1315
    %v1326 = vpack.c.b16 %v1318, %v1317
    %1335 = vmatprep.subr.bf16.mxu0 0
    %1336 = vmatpush1.bf16.msra.mxu0 %v1319
    %1337 = vmatprep.subr.bf16.mxu0 0
    %1338 = vmatpush1.bf16.msra.mxu0 %v1320
    %1339 = vmatprep.subr.bf16.mxu0 0
    %1340 = vmatpush1.bf16.msra.mxu0 %v1321
    %1341 = vmatprep.subr.bf16.mxu0 0
    %1342 = vmatpush1.bf16.msra.mxu0 %v1322
    %1343 = vmatprep.subr.bf16.mxu0 0
    %1344 = vmatpush1.bf16.msra.mxu0 %v1323
    %1345 = vmatprep.subr.bf16.mxu0 0
    %1346 = vmatpush1.bf16.msra.mxu0 %v1324
    %1347 = vmatprep.subr.bf16.mxu0 0
    %1348 = vmatpush1.bf16.msra.mxu0 %v1325
    %1349 = vmatprep.subr.bf16.mxu0 0
    %1350 = vmatpush1.bf16.msra.mxu0 %v1326
    %1351 = vmatprep.subr.bf16.mxu0 0
    %1352 = vmatpush1.bf16.msra.mxu0 0
    %1353 = vmatprep.subr.bf16.mxu0 0
    %1354 = vmatpush1.bf16.msra.mxu0 0
    %1355 = vmatprep.subr.bf16.mxu0 0
    %1356 = vmatpush1.bf16.msra.mxu0 0
    %1357 = vmatprep.subr.bf16.mxu0 0
    %1358 = vmatpush1.bf16.msra.mxu0 0
    %1359 = vmatprep.subr.bf16.mxu0 0
    %1360 = vmatpush1.bf16.msra.mxu0 0
    %1361 = vmatprep.subr.bf16.mxu0 0
    %1362 = vmatpush1.bf16.msra.mxu0 0
    %1363 = vmatprep.subr.bf16.mxu0 0
    %1364 = vmatpush1.bf16.msra.mxu0 0
    %1365 = vmatprep.subr.bf16.mxu0 0
    %1366 = vmatpush1.bf16.msra.mxu0 0
    %1367 = vmatprep.mubr.bf16.mxu0 0
    %1368 = vmatmul.mubr.bf16.gmra.mrb[0].mxu0 %v1261
    %v1369 = vpop.f32.mrb[0].mxu0
    %v1370 = vadd.f32 %v1285, %v1369
    %v1371 = vpop.f32.mrb[0].mxu0
    %v1372 = vpop.f32.mrb[0].mxu0
    %v1373 = vadd.f32 %v1285, %v1372
    %v1374 = vpop.f32.mrb[0].mxu0
    %1375 = vdwg.mxu0
    %v1376 = vmax.f32 %v1370, 0.0
    %v1377 = vmax.f32 %v1373, 0.0
    %v1378 = vadd.f32 %v1376, %v1377
    %v1379 = vrot.slane %v1378, 4
    %v1380 = vadd.f32 %v1378, %v1379
    %v1381 = vrot.slane %v1380, 2
    %v1382 = vadd.f32 %v1380, %v1381
    %v1383 = vrot.slane %v1382, 1
    %v1384 = vadd.f32 %v1382, %v1383
    %v1385 = vmul.f32 %v1384, %v420
    %v1386 = vmul.f32 %v1376, %v1376
    %v1387 = vmul.f32 %v1377, %v1377
    %v1388 = vadd.f32 %v1386, %v1387
    %v1389 = vrot.slane %v1388, 4
    %v1390 = vadd.f32 %v1388, %v1389
    %v1391 = vrot.slane %v1390, 2
    %v1392 = vadd.f32 %v1390, %v1391
    %v1393 = vrot.slane %v1392, 1
    %v1394 = vadd.f32 %v1392, %v1393
    %v1395 = vmul.f32 %v1394, %v420
    %v1396 = vmul.f32 %v1385, %v1385
    %v1397 = vsub.f32 %v1395, %v1396
    %v1398 = vsub.f32 %v1376, %v1385
    %v1399 = vsub.f32 %v1377, %v1385
    %v1400 = vadd.f32 %v1397, 1e-05
    %v1401 = vrsqrt.pop %v1400
    %v1402 = vmul.f32 %v1398, %v1401
    %v1403 = vmul.f32 %v1399, %v1401
    %s1404 = scalar_lea.vmem %s6, 3
    %v1405 = vld [vmem:[%s1404] sm:$0x1]
    %v1407 = vlaneseq
    %v1408 = vshrl.u32 %v1407, 7
    %v1409 = vsub.s32 0, %v1408
    %v1410 = vrot.slane %v1405, %v1409
    %v1412 = vmul.f32 %v1402, %v1410
    %v1413 = vmul.f32 %v1403, %v1410
    %s1414 = scalar_lea.vmem %s7, 3
    %v1415 = vld [vmem:[%s1414] sm:$0x1]
    %v1417 = vlaneseq
    %v1418 = vshrl.u32 %v1417, 7
    %v1419 = vsub.s32 0, %v1418
    %v1420 = vrot.slane %v1415, %v1419
    %v1422 = vadd.f32 %v1412, %v1420
    %v1423 = vadd.f32 %v1413, %v1420
    %v1424 = vpack.c.bf16 %v1423, %v1422
    %1425 = vmatprep.subr.bf16.mxu0 0
    %1426 = vmatpush1.bf16.msra.mxu0 %v1424
    %1427 = vmatprep.subr.bf16.mxu0 0
    %1428 = vmatpush1.bf16.msra.mxu0 0
    %1429 = vmatprep.subr.bf16.mxu0 0
    %1430 = vmatpush1.bf16.msra.mxu0 0
    %1431 = vmatprep.subr.bf16.mxu0 0
    %1432 = vmatpush1.bf16.msra.mxu0 0
    %1433 = vmatprep.subr.bf16.mxu0 0
    %1434 = vmatpush1.bf16.msra.mxu0 0
    %1435 = vmatprep.subr.bf16.mxu0 0
    %1436 = vmatpush1.bf16.msra.mxu0 0
    %1437 = vmatprep.subr.bf16.mxu0 0
    %1438 = vmatpush1.bf16.msra.mxu0 0
    %1439 = vmatprep.subr.bf16.mxu0 0
    %1440 = vmatpush1.bf16.msra.mxu0 0
    %1441 = vmatprep.subr.bf16.mxu0 0
    %1442 = vmatpush1.bf16.msra.mxu0 0
    %1443 = vmatprep.subr.bf16.mxu0 0
    %1444 = vmatpush1.bf16.msra.mxu0 0
    %1445 = vmatprep.subr.bf16.mxu0 0
    %1446 = vmatpush1.bf16.msra.mxu0 0
    %1447 = vmatprep.subr.bf16.mxu0 0
    %1448 = vmatpush1.bf16.msra.mxu0 0
    %1449 = vmatprep.subr.bf16.mxu0 0
    %1450 = vmatpush1.bf16.msra.mxu0 0
    %1451 = vmatprep.subr.bf16.mxu0 0
    %1452 = vmatpush1.bf16.msra.mxu0 0
    %1453 = vmatprep.subr.bf16.mxu0 0
    %1454 = vmatpush1.bf16.msra.mxu0 0
    %1455 = vmatprep.subr.bf16.mxu0 0
    %1456 = vmatpush1.bf16.msra.mxu0 0
    %1457 = vmatprep.mubr.bf16.mxu0 0
    %1458 = vmatmul.mubr.bf16.gmra.mrb[0].mxu0 %v140
    %v1459 = vpop.f32.mrb[0].mxu0
    %v1460 = vadd.f32 0.0, %v1459
    %v1461 = vpop.f32.mrb[0].mxu0
    %v1462 = vpop.f32.mrb[0].mxu0
    %v1463 = vadd.f32 0.0, %v1462
    %v1464 = vpop.f32.mrb[0].mxu0
    %1465 = vdwg.mxu0
    %v1466 = vpack.c.bf16 %v1463, %v1460
    %s1467 = scalar_lea.vmem [#allocation7], 256
    %v1468 = vld [vmem:[%s1467] sm:$0xf]
    %v1469 = vld [vmem:[%s1467 + $0x4] sm:$0xf]
    %v1470 = vld [vmem:[%s1467 + $0x8] sm:$0xf]
    %v1471 = vld [vmem:[%s1467 + $0xc] sm:$0xf]
    %v1472 = vld [vmem:[%s1467 + $0x10] sm:$0xf]
    %v1473 = vld [vmem:[%s1467 + $0x14] sm:$0xf]
    %v1474 = vld [vmem:[%s1467 + $0x18] sm:$0xf]
    %v1475 = vld [vmem:[%s1467 + $0x1c] sm:$0xf]
    %v1476 = vld [vmem:[%s1467 + $0x20] sm:$0xf]
    %v1477 = vld [vmem:[%s1467 + $0x24] sm:$0xf]
    %v1478 = vld [vmem:[%s1467 + $0x28] sm:$0xf]
    %v1479 = vld [vmem:[%s1467 + $0x2c] sm:$0xf]
    %v1480 = vld [vmem:[%s1467 + $0x30] sm:$0xf]
    %v1481 = vld [vmem:[%s1467 + $0x34] sm:$0xf]
    %v1482 = vld [vmem:[%s1467 + $0x38] sm:$0xf]
    %v1483 = vld [vmem:[%s1467 + $0x3c] sm:$0xf]
    %s1484 = scalar_lea.vmem %s3, 4
    %v1485 = vld [vmem:[%s1484] sm:$0x1]
    %v1487 = vlaneseq
    %v1488 = vshrl.u32 %v1487, 7
    %v1489 = vsub.s32 0, %v1488
    %v1490 = vrot.slane %v1485, %v1489
    %v1508 = vunpack.c.l.b16 %v1468
    %v1509 = vunpack.c.l.b16 %v1469
    %v1510 = vunpack.c.l.b16 %v1470
    %v1511 = vunpack.c.l.b16 %v1471
    %v1512 = vunpack.c.l.b16 %v1472
    %v1513 = vunpack.c.l.b16 %v1473
    %v1514 = vunpack.c.l.b16 %v1474
    %v1515 = vunpack.c.l.b16 %v1475
    %v1516 = vunpack.c.l.b16 %v1476
    %v1517 = vunpack.c.l.b16 %v1477
    %v1518 = vunpack.c.l.b16 %v1478
    %v1519 = vunpack.c.l.b16 %v1479
    %v1520 = vunpack.c.l.b16 %v1480
    %v1521 = vunpack.c.l.b16 %v1481
    %v1522 = vunpack.c.l.b16 %v1482
    %v1523 = vunpack.c.l.b16 %v1483
    %v1524 = vpack.c.b16 %v1509, %v1508
    %v1525 = vpack.c.b16 %v1511, %v1510
    %v1526 = vpack.c.b16 %v1513, %v1512
    %v1527 = vpack.c.b16 %v1515, %v1514
    %v1528 = vpack.c.b16 %v1517, %v1516
    %v1529 = vpack.c.b16 %v1519, %v1518
    %v1530 = vpack.c.b16 %v1521, %v1520
    %v1531 = vpack.c.b16 %v1523, %v1522
    %1540 = vmatprep.subr.bf16.mxu0 0
    %1541 = vmatpush1.bf16.msra.mxu0 %v1524
    %1542 = vmatprep.subr.bf16.mxu0 0
    %1543 = vmatpush1.bf16.msra.mxu0 %v1525
    %1544 = vmatprep.subr.bf16.mxu0 0
    %1545 = vmatpush1.bf16.msra.mxu0 %v1526
    %1546 = vmatprep.subr.bf16.mxu0 0
    %1547 = vmatpush1.bf16.msra.mxu0 %v1527
    %1548 = vmatprep.subr.bf16.mxu0 0
    %1549 = vmatpush1.bf16.msra.mxu0 %v1528
    %1550 = vmatprep.subr.bf16.mxu0 0
    %1551 = vmatpush1.bf16.msra.mxu0 %v1529
    %1552 = vmatprep.subr.bf16.mxu0 0
    %1553 = vmatpush1.bf16.msra.mxu0 %v1530
    %1554 = vmatprep.subr.bf16.mxu0 0
    %1555 = vmatpush1.bf16.msra.mxu0 %v1531
    %1556 = vmatprep.subr.bf16.mxu0 0
    %1557 = vmatpush1.bf16.msra.mxu0 0
    %1558 = vmatprep.subr.bf16.mxu0 0
    %1559 = vmatpush1.bf16.msra.mxu0 0
    %1560 = vmatprep.subr.bf16.mxu0 0
    %1561 = vmatpush1.bf16.msra.mxu0 0
    %1562 = vmatprep.subr.bf16.mxu0 0
    %1563 = vmatpush1.bf16.msra.mxu0 0
    %1564 = vmatprep.subr.bf16.mxu0 0
    %1565 = vmatpush1.bf16.msra.mxu0 0
    %1566 = vmatprep.subr.bf16.mxu0 0
    %1567 = vmatpush1.bf16.msra.mxu0 0
    %1568 = vmatprep.subr.bf16.mxu0 0
    %1569 = vmatpush1.bf16.msra.mxu0 0
    %1570 = vmatprep.subr.bf16.mxu0 0
    %1571 = vmatpush1.bf16.msra.mxu0 0
    %1572 = vmatprep.mubr.bf16.mxu0 0
    %1573 = vmatmul.mubr.bf16.gmra.mrb[0].mxu0 %v1466
    %v1574 = vpop.f32.mrb[0].mxu0
    %v1575 = vadd.f32 %v1490, %v1574
    %v1576 = vpop.f32.mrb[0].mxu0
    %v1577 = vpop.f32.mrb[0].mxu0
    %v1578 = vadd.f32 %v1490, %v1577
    %v1579 = vpop.f32.mrb[0].mxu0
    %1580 = vdwg.mxu0
    %v1581 = vmax.f32 %v1575, 0.0
    %v1582 = vmax.f32 %v1578, 0.0
    %v1583 = vpack.c.bf16 %v1582, %v1581
    %s1584 = scalar_lea.vmem [#allocation8], 256
    %v1585 = vld [vmem:[%s1584] sm:$0xf]
    %v1586 = vld [vmem:[%s1584 + $0x4] sm:$0xf]
    %v1587 = vld [vmem:[%s1584 + $0x8] sm:$0xf]
    %v1588 = vld [vmem:[%s1584 + $0xc] sm:$0xf]
    %v1589 = vld [vmem:[%s1584 + $0x10] sm:$0xf]
    %v1590 = vld [vmem:[%s1584 + $0x14] sm:$0xf]
    %v1591 = vld [vmem:[%s1584 + $0x18] sm:$0xf]
    %v1592 = vld [vmem:[%s1584 + $0x1c] sm:$0xf]
    %v1593 = vld [vmem:[%s1584 + $0x20] sm:$0xf]
    %v1594 = vld [vmem:[%s1584 + $0x24] sm:$0xf]
    %v1595 = vld [vmem:[%s1584 + $0x28] sm:$0xf]
    %v1596 = vld [vmem:[%s1584 + $0x2c] sm:$0xf]
    %v1597 = vld [vmem:[%s1584 + $0x30] sm:$0xf]
    %v1598 = vld [vmem:[%s1584 + $0x34] sm:$0xf]
    %v1599 = vld [vmem:[%s1584 + $0x38] sm:$0xf]
    %v1600 = vld [vmem:[%s1584 + $0x3c] sm:$0xf]
    %s1601 = scalar_lea.vmem %s5, 4
    %v1602 = vld [vmem:[%s1601] sm:$0x1]
    %v1604 = vlaneseq
    %v1605 = vshrl.u32 %v1604, 7
    %v1606 = vsub.s32 0, %v1605
    %v1607 = vrot.slane %v1602, %v1606
    %v1625 = vunpack.c.l.b16 %v1585
    %v1626 = vunpack.c.l.b16 %v1586
    %v1627 = vunpack.c.l.b16 %v1587
    %v1628 = vunpack.c.l.b16 %v1588
    %v1629 = vunpack.c.l.b16 %v1589
    %v1630 = vunpack.c.l.b16 %v1590
    %v1631 = vunpack.c.l.b16 %v1591
    %v1632 = vunpack.c.l.b16 %v1592
    %v1633 = vunpack.c.l.b16 %v1593
    %v1634 = vunpack.c.l.b16 %v1594
    %v1635 = vunpack.c.l.b16 %v1595
    %v1636 = vunpack.c.l.b16 %v1596
    %v1637 = vunpack.c.l.b16 %v1597
    %v1638 = vunpack.c.l.b16 %v1598
    %v1639 = vunpack.c.l.b16 %v1599
    %v1640 = vunpack.c.l.b16 %v1600
    %v1641 = vpack.c.b16 %v1626, %v1625
    %v1642 = vpack.c.b16 %v1628, %v1627
    %v1643 = vpack.c.b16 %v1630, %v1629
    %v1644 = vpack.c.b16 %v1632, %v1631
    %v1645 = vpack.c.b16 %v1634, %v1633
    %v1646 = vpack.c.b16 %v1636, %v1635
    %v1647 = vpack.c.b16 %v1638, %v1637
    %v1648 = vpack.c.b16 %v1640, %v1639
    %1657 = vmatprep.subr.bf16.mxu0 0
    %1658 = vmatpush1.bf16.msra.mxu0 %v1641
    %1659 = vmatprep.subr.bf16.mxu0 0
    %1660 = vmatpush1.bf16.msra.mxu0 %v1642
    %1661 = vmatprep.subr.bf16.mxu0 0
    %1662 = vmatpush1.bf16.msra.mxu0 %v1643
    %1663 = vmatprep.subr.bf16.mxu0 0
    %1664 = vmatpush1.bf16.msra.mxu0 %v1644
    %1665 = vmatprep.subr.bf16.mxu0 0
    %1666 = vmatpush1.bf16.msra.mxu0 %v1645
    %1667 = vmatprep.subr.bf16.mxu0 0
    %1668 = vmatpush1.bf16.msra.mxu0 %v1646
    %1669 = vmatprep.subr.bf16.mxu0 0
    %1670 = vmatpush1.bf16.msra.mxu0 %v1647
    %1671 = vmatprep.subr.bf16.mxu0 0
    %1672 = vmatpush1.bf16.msra.mxu0 %v1648
    %1673 = vmatprep.subr.bf16.mxu0 0
    %1674 = vmatpush1.bf16.msra.mxu0 0
    %1675 = vmatprep.subr.bf16.mxu0 0
    %1676 = vmatpush1.bf16.msra.mxu0 0
    %1677 = vmatprep.subr.bf16.mxu0 0
    %1678 = vmatpush1.bf16.msra.mxu0 0
    %1679 = vmatprep.subr.bf16.mxu0 0
    %1680 = vmatpush1.bf16.msra.mxu0 0
    %1681 = vmatprep.subr.bf16.mxu0 0
    %1682 = vmatpush1.bf16.msra.mxu0 0
    %1683 = vmatprep.subr.bf16.mxu0 0
    %1684 = vmatpush1.bf16.msra.mxu0 0
    %1685 = vmatprep.subr.bf16.mxu0 0
    %1686 = vmatpush1.bf16.msra.mxu0 0
    %1687 = vmatprep.subr.bf16.mxu0 0
    %1688 = vmatpush1.bf16.msra.mxu0 0
    %1689 = vmatprep.mubr.bf16.mxu0 0
    %1690 = vmatmul.mubr.bf16.gmra.mrb[0].mxu0 %v1583
    %v1691 = vpop.f32.mrb[0].mxu0
    %v1692 = vadd.f32 %v1607, %v1691
    %v1693 = vpop.f32.mrb[0].mxu0
    %v1694 = vpop.f32.mrb[0].mxu0
    %v1695 = vadd.f32 %v1607, %v1694
    %v1696 = vpop.f32.mrb[0].mxu0
    %1697 = vdwg.mxu0
    %v1698 = vmax.f32 %v1692, 0.0
    %v1699 = vmax.f32 %v1695, 0.0
    %v1700 = vadd.f32 %v1698, %v1699
    %v1701 = vrot.slane %v1700, 4
    %v1702 = vadd.f32 %v1700, %v1701
    %v1703 = vrot.slane %v1702, 2
    %v1704 = vadd.f32 %v1702, %v1703
    %v1705 = vrot.slane %v1704, 1
    %v1706 = vadd.f32 %v1704, %v1705
    %v1707 = vmul.f32 %v1706, %v420
    %v1708 = vmul.f32 %v1698, %v1698
    %v1709 = vmul.f32 %v1699, %v1699
    %v1710 = vadd.f32 %v1708, %v1709
    %v1711 = vrot.slane %v1710, 4
    %v1712 = vadd.f32 %v1710, %v1711
    %v1713 = vrot.slane %v1712, 2
    %v1714 = vadd.f32 %v1712, %v1713
    %v1715 = vrot.slane %v1714, 1
    %v1716 = vadd.f32 %v1714, %v1715
    %v1717 = vmul.f32 %v1716, %v420
    %v1718 = vmul.f32 %v1707, %v1707
    %v1719 = vsub.f32 %v1717, %v1718
    %v1720 = vsub.f32 %v1698, %v1707
    %v1721 = vsub.f32 %v1699, %v1707
    %v1722 = vadd.f32 %v1719, 1e-05
    %v1723 = vrsqrt.pop %v1722
    %v1724 = vmul.f32 %v1720, %v1723
    %v1725 = vmul.f32 %v1721, %v1723
    %s1726 = scalar_lea.vmem %s6, 4
    %v1727 = vld [vmem:[%s1726] sm:$0x1]
    %v1729 = vlaneseq
    %v1730 = vshrl.u32 %v1729, 7
    %v1731 = vsub.s32 0, %v1730
    %v1732 = vrot.slane %v1727, %v1731
    %v1734 = vmul.f32 %v1724, %v1732
    %v1735 = vmul.f32 %v1725, %v1732
    %s1736 = scalar_lea.vmem %s7, 4
    %v1737 = vld [vmem:[%s1736] sm:$0x1]
    %v1739 = vlaneseq
    %v1740 = vshrl.u32 %v1739, 7
    %v1741 = vsub.s32 0, %v1740
    %v1742 = vrot.slane %v1737, %v1741
    %v1744 = vadd.f32 %v1734, %v1742
    %v1745 = vadd.f32 %v1735, %v1742
    %v1746 = vld [vmem:[%s8] sm:$0x1]
    %v1747 = vpack.c.bf16 %v1745, %v1744
    %v1749 = vsel %vm138, %v1746, 0
    %1751 = vmatprep.subr.bf16.mxu0 0
    %1752 = vmatpush1.bf16.msra.mxu0 %v1747
    %1753 = vmatprep.subr.bf16.mxu0 0
    %1754 = vmatpush1.bf16.msra.mxu0 0
    %1755 = vmatprep.subr.bf16.mxu0 0
    %1756 = vmatpush1.bf16.msra.mxu0 0
    %1757 = vmatprep.subr.bf16.mxu0 0
    %1758 = vmatpush1.bf16.msra.mxu0 0
    %1759 = vmatprep.subr.bf16.mxu0 0
    %1760 = vmatpush1.bf16.msra.mxu0 0
    %1761 = vmatprep.subr.bf16.mxu0 0
    %1762 = vmatpush1.bf16.msra.mxu0 0
    %1763 = vmatprep.subr.bf16.mxu0 0
    %1764 = vmatpush1.bf16.msra.mxu0 0
    %1765 = vmatprep.subr.bf16.mxu0 0
    %1766 = vmatpush1.bf16.msra.mxu0 0
    %1767 = vmatprep.subr.bf16.mxu0 0
    %1768 = vmatpush1.bf16.msra.mxu0 0
    %1769 = vmatprep.subr.bf16.mxu0 0
    %1770 = vmatpush1.bf16.msra.mxu0 0
    %1771 = vmatprep.subr.bf16.mxu0 0
    %1772 = vmatpush1.bf16.msra.mxu0 0
    %1773 = vmatprep.subr.bf16.mxu0 0
    %1774 = vmatpush1.bf16.msra.mxu0 0
    %1775 = vmatprep.subr.bf16.mxu0 0
    %1776 = vmatpush1.bf16.msra.mxu0 0
    %1777 = vmatprep.subr.bf16.mxu0 0
    %1778 = vmatpush1.bf16.msra.mxu0 0
    %1779 = vmatprep.subr.bf16.mxu0 0
    %1780 = vmatpush1.bf16.msra.mxu0 0
    %1781 = vmatprep.subr.bf16.mxu0 0
    %1782 = vmatpush1.bf16.msra.mxu0 0
    %1783 = vmatprep.mubr.bf16.mxu0 0
    %1784 = vmatmul.mubr.bf16.gmra.mrb[0].mxu0 %v1749
    %v1785 = vpop.f32.mrb[0].mxu0
    %v1786 = vadd.f32 0.0, %v1785
    %v1787 = vpop.f32.mrb[0].mxu0
    %v1788 = vpop.f32.mrb[0].mxu0
    %v1789 = vpop.f32.mrb[0].mxu0
    %1790 = vdwg.mxu0
    %v1791 = vpack.c.bf16 %v1786, %v1786
    %v1792 = vld [vmem:[#allocation10] sm:$0xf]
    %v1793 = vld [vmem:[#allocation10 + $0x4] sm:$0xf]
    %v1794 = vld [vmem:[#allocation10 + $0x8] sm:$0xf]
    %v1795 = vld [vmem:[#allocation10 + $0xc] sm:$0xf]
    %v1796 = vld [vmem:[#allocation10 + $0x10] sm:$0xf]
    %v1797 = vld [vmem:[#allocation10 + $0x14] sm:$0xf]
    %v1798 = vld [vmem:[#allocation10 + $0x18] sm:$0xf]
    %v1799 = vld [vmem:[#allocation10 + $0x1c] sm:$0xf]
    %v1800 = vld [vmem:[#allocation10 + $0x20] sm:$0xf]
    %v1801 = vld [vmem:[#allocation10 + $0x24] sm:$0xf]
    %v1802 = vld [vmem:[#allocation10 + $0x28] sm:$0xf]
    %v1803 = vld [vmem:[#allocation10 + $0x2c] sm:$0xf]
    %v1804 = vld [vmem:[#allocation10 + $0x30] sm:$0xf]
    %v1805 = vld [vmem:[#allocation10 + $0x34] sm:$0xf]
    %v1806 = vld [vmem:[#allocation10 + $0x38] sm:$0xf]
    %v1807 = vld [vmem:[#allocation10 + $0x3c] sm:$0xf]
    %v1808 = vld [vmem:[%s10] sm:$0x1]
    %v1810 = vlaneseq
    %v1811 = vshrl.u32 %v1810, 7
    %v1812 = vsub.s32 0, %v1811
    %v1813 = vrot.slane %v1808, %v1812
    %v1831 = vunpack.c.l.b16 %v1792
    %v1832 = vunpack.c.l.b16 %v1793
    %v1833 = vunpack.c.l.b16 %v1794
    %v1834 = vunpack.c.l.b16 %v1795
    %v1835 = vunpack.c.l.b16 %v1796
    %v1836 = vunpack.c.l.b16 %v1797
    %v1837 = vunpack.c.l.b16 %v1798
    %v1838 = vunpack.c.l.b16 %v1799
    %v1839 = vunpack.c.l.b16 %v1800
    %v1840 = vunpack.c.l.b16 %v1801
    %v1841 = vunpack.c.l.b16 %v1802
    %v1842 = vunpack.c.l.b16 %v1803
    %v1843 = vunpack.c.l.b16 %v1804
    %v1844 = vunpack.c.l.b16 %v1805
    %v1845 = vunpack.c.l.b16 %v1806
    %v1846 = vunpack.c.l.b16 %v1807
    %v1847 = vpack.c.b16 %v1832, %v1831
    %v1848 = vpack.c.b16 %v1834, %v1833
    %v1849 = vpack.c.b16 %v1836, %v1835
    %v1850 = vpack.c.b16 %v1838, %v1837
    %v1851 = vpack.c.b16 %v1840, %v1839
    %v1852 = vpack.c.b16 %v1842, %v1841
    %v1853 = vpack.c.b16 %v1844, %v1843
    %v1854 = vpack.c.b16 %v1846, %v1845
    %1863 = vmatprep.subr.bf16.mxu0 0
    %1864 = vmatpush1.bf16.msra.mxu0 %v1847
    %1865 = vmatprep.subr.bf16.mxu0 0
    %1866 = vmatpush1.bf16.msra.mxu0 %v1848
    %1867 = vmatprep.subr.bf16.mxu0 0
    %1868 = vmatpush1.bf16.msra.mxu0 %v1849
    %1869 = vmatprep.subr.bf16.mxu0 0
    %1870 = vmatpush1.bf16.msra.mxu0 %v1850
    %1871 = vmatprep.subr.bf16.mxu0 0
    %1872 = vmatpush1.bf16.msra.mxu0 %v1851
    %1873 = vmatprep.subr.bf16.mxu0 0
    %1874 = vmatpush1.bf16.msra.mxu0 %v1852
    %1875 = vmatprep.subr.bf16.mxu0 0
    %1876 = vmatpush1.bf16.msra.mxu0 %v1853
    %1877 = vmatprep.subr.bf16.mxu0 0
    %1878 = vmatpush1.bf16.msra.mxu0 %v1854
    %1879 = vmatprep.subr.bf16.mxu0 0
    %1880 = vmatpush1.bf16.msra.mxu0 0
    %1881 = vmatprep.subr.bf16.mxu0 0
    %1882 = vmatpush1.bf16.msra.mxu0 0
    %1883 = vmatprep.subr.bf16.mxu0 0
    %1884 = vmatpush1.bf16.msra.mxu0 0
    %1885 = vmatprep.subr.bf16.mxu0 0
    %1886 = vmatpush1.bf16.msra.mxu0 0
    %1887 = vmatprep.subr.bf16.mxu0 0
    %1888 = vmatpush1.bf16.msra.mxu0 0
    %1889 = vmatprep.subr.bf16.mxu0 0
    %1890 = vmatpush1.bf16.msra.mxu0 0
    %1891 = vmatprep.subr.bf16.mxu0 0
    %1892 = vmatpush1.bf16.msra.mxu0 0
    %1893 = vmatprep.subr.bf16.mxu0 0
    %1894 = vmatpush1.bf16.msra.mxu0 0
    %1895 = vmatprep.mubr.bf16.mxu0 0
    %1896 = vmatmul.mubr.bf16.gmra.mrb[0].mxu0 %v1791
    %v1897 = vpop.f32.mrb[0].mxu0
    %v1898 = vadd.f32 %v1813, %v1897
    %v1899 = vpop.f32.mrb[0].mxu0
    %v1900 = vpop.f32.mrb[0].mxu0
    %v1901 = vpop.f32.mrb[0].mxu0
    %1902 = vdwg.mxu0
    %v1903 = vmax.f32 %v1898, 0.0
    %v1904 = vpack.c.bf16 %v1903, %v1903
    %v1905 = vld [vmem:[#allocation11] sm:$0xf]
    %v1906 = vld [vmem:[#allocation11 + $0x4] sm:$0xf]
    %v1907 = vld [vmem:[#allocation11 + $0x8] sm:$0xf]
    %v1908 = vld [vmem:[#allocation11 + $0xc] sm:$0xf]
    %v1909 = vld [vmem:[#allocation11 + $0x10] sm:$0xf]
    %v1910 = vld [vmem:[#allocation11 + $0x14] sm:$0xf]
    %v1911 = vld [vmem:[#allocation11 + $0x18] sm:$0xf]
    %v1912 = vld [vmem:[#allocation11 + $0x1c] sm:$0xf]
    %v1913 = vld [vmem:[#allocation11 + $0x20] sm:$0xf]
    %v1914 = vld [vmem:[#allocation11 + $0x24] sm:$0xf]
    %v1915 = vld [vmem:[#allocation11 + $0x28] sm:$0xf]
    %v1916 = vld [vmem:[#allocation11 + $0x2c] sm:$0xf]
    %v1917 = vld [vmem:[#allocation11 + $0x30] sm:$0xf]
    %v1918 = vld [vmem:[#allocation11 + $0x34] sm:$0xf]
    %v1919 = vld [vmem:[#allocation11 + $0x38] sm:$0xf]
    %v1920 = vld [vmem:[#allocation11 + $0x3c] sm:$0xf]
    %v1921 = vld [vmem:[%s12] sm:$0x1]
    %v1923 = vlaneseq
    %v1924 = vshrl.u32 %v1923, 7
    %v1925 = vsub.s32 0, %v1924
    %v1926 = vrot.slane %v1921, %v1925
    %v1944 = vunpack.c.l.b16 %v1905
    %v1945 = vunpack.c.l.b16 %v1906
    %v1946 = vunpack.c.l.b16 %v1907
    %v1947 = vunpack.c.l.b16 %v1908
    %v1948 = vunpack.c.l.b16 %v1909
    %v1949 = vunpack.c.l.b16 %v1910
    %v1950 = vunpack.c.l.b16 %v1911
    %v1951 = vunpack.c.l.b16 %v1912
    %v1952 = vunpack.c.l.b16 %v1913
    %v1953 = vunpack.c.l.b16 %v1914
    %v1954 = vunpack.c.l.b16 %v1915
    %v1955 = vunpack.c.l.b16 %v1916
    %v1956 = vunpack.c.l.b16 %v1917
    %v1957 = vunpack.c.l.b16 %v1918
    %v1958 = vunpack.c.l.b16 %v1919
    %v1959 = vunpack.c.l.b16 %v1920
    %v1960 = vpack.c.b16 %v1945, %v1944
    %v1961 = vpack.c.b16 %v1947, %v1946
    %v1962 = vpack.c.b16 %v1949, %v1948
    %v1963 = vpack.c.b16 %v1951, %v1950
    %v1964 = vpack.c.b16 %v1953, %v1952
    %v1965 = vpack.c.b16 %v1955, %v1954
    %v1966 = vpack.c.b16 %v1957, %v1956
    %v1967 = vpack.c.b16 %v1959, %v1958
    %1976 = vmatprep.subr.bf16.mxu0 0
    %1977 = vmatpush1.bf16.msra.mxu0 %v1960
    %1978 = vmatprep.subr.bf16.mxu0 0
    %1979 = vmatpush1.bf16.msra.mxu0 %v1961
    %1980 = vmatprep.subr.bf16.mxu0 0
    %1981 = vmatpush1.bf16.msra.mxu0 %v1962
    %1982 = vmatprep.subr.bf16.mxu0 0
    %1983 = vmatpush1.bf16.msra.mxu0 %v1963
    %1984 = vmatprep.subr.bf16.mxu0 0
    %1985 = vmatpush1.bf16.msra.mxu0 %v1964
    %1986 = vmatprep.subr.bf16.mxu0 0
    %1987 = vmatpush1.bf16.msra.mxu0 %v1965
    %1988 = vmatprep.subr.bf16.mxu0 0
    %1989 = vmatpush1.bf16.msra.mxu0 %v1966
    %1990 = vmatprep.subr.bf16.mxu0 0
    %1991 = vmatpush1.bf16.msra.mxu0 %v1967
    %1992 = vmatprep.subr.bf16.mxu0 0
    %1993 = vmatpush1.bf16.msra.mxu0 0
    %1994 = vmatprep.subr.bf16.mxu0 0
    %1995 = vmatpush1.bf16.msra.mxu0 0
    %1996 = vmatprep.subr.bf16.mxu0 0
    %1997 = vmatpush1.bf16.msra.mxu0 0
    %1998 = vmatprep.subr.bf16.mxu0 0
    %1999 = vmatpush1.bf16.msra.mxu0 0
    %2000 = vmatprep.subr.bf16.mxu0 0
    %2001 = vmatpush1.bf16.msra.mxu0 0
    %2002 = vmatprep.subr.bf16.mxu0 0
    %2003 = vmatpush1.bf16.msra.mxu0 0
    %2004 = vmatprep.subr.bf16.mxu0 0
    %2005 = vmatpush1.bf16.msra.mxu0 0
    %2006 = vmatprep.subr.bf16.mxu0 0
    %2007 = vmatpush1.bf16.msra.mxu0 0
    %2008 = vmatprep.mubr.bf16.mxu0 0
    %2009 = vmatmul.mubr.bf16.gmra.mrb[0].mxu0 %v1904
    %v2010 = vpop.f32.mrb[0].mxu0
    %v2011 = vadd.f32 %v1926, %v2010
    %v2012 = vpop.f32.mrb[0].mxu0
    %v2013 = vpop.f32.mrb[0].mxu0
    %v2014 = vpop.f32.mrb[0].mxu0
    %2015 = vdwg.mxu0
    %vm2016 = vcmask 1041408
    %v2017 = vsel %vm2016, %v2011, -inf
    %2018 = vmax.xlane.f32.xlu0 %v2017
    %v2019 = vpop.xlane.xlu0 %2018
    %v2020 = vsub.f32 %v2011, %v2019
    %v2021 = vmul.f32 %v2020, 1.442695
    %v2022 = vpow.pop %v2021
    %v2023 = vsel %vm2016, %v2022, 0.0
    %2024 = vadd.xlane.f32.xlu0 %v2023
    %v2025 = vpop.xlane.xlu0 %2024
    %v2026 = vlog2.pop %v2025
    %v2027 = vmul.f32 %v2026, 0.6931472
    %v2028 = vsub.f32 %v2020, %v2027
    %2029 = vst [vmem:[#allocation13] sm:$0x3] %v2028
    // Predicated region
    $region78: #{tpu_custom_call.1} parent=1 // pred_check
      _
    $region79: #{tpu_custom_call.1} parent=1 // pred_check_branch
      %2031 = sbr.rel (0) target = $region81
    $region80: #{tpu_custom_call.1} parent=1 // pred_region
      %s2033 = ssub.s32 32, 32
      %2034 = vsyncadd [#allocation4], %s2033
      %s2036 = sshll.u32 [#allocation13], 4
      %s2037 = int_to_ptr.vmem [resolvable:$true] %s2036
      %2039 = dma.vmem_to_hbm [thread:$0]  %s2037, 32, %s13, [#allocation4]
    $region81: #{tpu_custom_call.1} parent=1 // pred_fallthru
      _
    // Predicated region
    $region82: #{tpu_custom_call.1} parent=1 // pred_check
      _
    $region83: #{tpu_custom_call.1} parent=1 // pred_check_branch
      %2041 = sbr.rel (0) target = $region85
    $region84: #{tpu_custom_call.1} parent=1 // pred_region
      %2042 = dma.done [#allocation4], 32
    $region85: #{tpu_custom_call.1} parent=1 // pred_fallthru
      _
    %2043 = vsyncpa [#allocation3], 1
    %2044 = vsyncpa [#allocation6], 1
    %2045 = vsyncpa [#allocation9], 1
    %2046 = vsyncpa [#allocation12], 1
    %2047 = vsyncpa [#allocation4], 1

</llo_original>
